<compile_context>
chip_gen: v7x
topology: tpu7x:2x2x1
jax: 0.10.0
libtpu: 0.0.40
codegen_flags: <defaults>
</compile_context>

<pallas_src>
import math

import jax
import jax.numpy as jnp
import numpy as np
from jax.experimental import pallas as pl
from jax.experimental.pallas import tpu as pltpu


# MXU operand dtype.  f32 keeps the strict 1e-4 check; set to jnp.bfloat16 on
# v6e/v7x (native bf16 MXU, half the weight/G bytes) and loosen the tolerance.
MXU_DTYPE = jnp.float32


def _round_up(x, m):
    return -(-x // m) * m


def _wx_layout(H, K):
    """Column layout of the fused x-side weight W_x_all.

    [ gate z/r weights (K blocks of 2H) | pad | update weights (K blocks of H) | pad ]
    with each region starting on a 128-lane boundary.
    """
    gate_w = 2 * K * H
    upd_off = _round_up(gate_w, 128)
    upd_w = K * H
    total = _round_up(upd_off + upd_w, 128)
    return gate_w, upd_off, upd_w, total


# --------------------------------------------------------------------------
# Fused decoder kernel: no grid, static unrolled loop over layers
# --------------------------------------------------------------------------
def _build_decoder_kernel(L, BN, H, K):
    GATE_W, UPD_OFF, UPD_W, _ = _wx_layout(H, K)

    def mdot(a, b):
        return jnp.dot(a.astype(MXU_DTYPE), b.astype(MXU_DTYPE),
                       preferred_element_type=jnp.float32)

    def kernel(x0_ref, h_ref, g_ref, wx_ref, wgh_ref, wuh_ref,
               bzr_ref, bu_ref, o_ref):
        # x0_ref : [BN, H]        zero-padded decoder input, batch folded into rows
        # h_ref  : [L, BN, H]     previous hidden state per layer
        # g_ref  : [K, BN, BN]    batch-block-diagonal Chebyshev supports kron(I_B, G_k)
        # wx_ref : [L, H, WX]     fused x-side weights (gate z/r + update), k on lanes
        # wgh_ref: [L, H, 2KH]    gate h-side weights, per-k [z_k|r_k] blocks
        # wuh_ref: [L, H, KH]     update h-side weights
        # bzr_ref: [L, 1, 2H]     gate bias [b_z | b_r]
        # bu_ref : [L, 1, H]      update bias
        # o_ref  : [L, BN, H]     per-layer output hidden states

        # Hoist the graph supports: loaded once, reused by every graph mix of
        # every layer (3 supports ~ a dozen vregs at these shapes).
        g = [g_ref[k] for k in range(K)]                       # K * [BN, BN] f32

        cur = x0_ref[...].astype(jnp.float32)                  # running layer input

        for l in range(L):                                     # static unroll over layers
            h = h_ref[l].astype(jnp.float32)                   # [BN, H]
            wx = wx_ref[l]                                     # [H, WX]
            wgh = wgh_ref[l]                                   # [H, 2KH]
            wuh = wuh_ref[l]                                   # [H, KH]
            bzr = bzr_ref[l].astype(jnp.float32)               # [1, 2H] (broadcasts)
            bu = bu_ref[l].astype(jnp.float32)                 # [1, H]

            # One wide feature matmul covers the gate x-part AND the update x-part.
            tx = mdot(cur, wx)                                 # [BN, WX]

            # ---- gates (z, r) jointly: (G_k @ [x,h]) @ W == G_k @ (x@Wx + h@Wh)
            tg = tx[:, :GATE_W] + mdot(h, wgh)                 # [BN, 2KH]
            acc_g = bzr
            for k in range(K):                                 # K small & static
                acc_g = acc_g + mdot(g[k], tg[:, k * 2 * H:(k + 1) * 2 * H])
            zr = jax.nn.sigmoid(acc_g)                         # [BN, 2H] = [z | r]
            z = zr[:, :H]
            r = zr[:, H:]
            rh = r * h

            # ---- candidate
            tu = tx[:, UPD_OFF:UPD_OFF + UPD_W] + mdot(rh, wuh)   # [BN, KH]
            acc_u = bu
            for k in range(K):
                acc_u = acc_u + mdot(g[k], tu[:, k * H:(k + 1) * H])
            n = jnp.tanh(acc_u)                                # [BN, H]

            # ---- GRU combine
            h_t = z * n + (1.0 - z) * h

            o_ref[l] = h_t                                     # static-index store
            cur = h_t                                          # feed next layer

    return kernel


# --------------------------------------------------------------------------
# Wrapper: weight repacking (fused under jit) + single pallas_call
# --------------------------------------------------------------------------
def _pack_layer_weights(p, c_in, H, K):
    """Repack one layer's PyTorch-layout weights into the kernel layout."""
    Wg = p["W_gate"].reshape(K, c_in + H, 2 * H)     # k-major rows (as in GCN.forward)
    Wu = p["W_upd"].reshape(K, c_in + H, H)
    Wgx, Wgh = Wg[:, :c_in, :], Wg[:, c_in:, :]      # x-part / h-part rows
    Wux, Wuh = Wu[:, :c_in, :], Wu[:, c_in:, :]

    def kcols(w, rows_pad):
        # [K, rows, C] -> [rows, K*C] (k-major lane blocks); zero-pad rows to rows_pad.
        Kk, rows, cols = w.shape
        out = jnp.transpose(w, (1, 0, 2)).reshape(rows, Kk * cols)
        if rows < rows_pad:
            out = jnp.concatenate(
                [out, jnp.zeros((rows_pad - rows, Kk * cols), out.dtype)], axis=0)
        return out

    wgx = kcols(Wgx, H)          # [H, K*2H], per-k blocks [z_k | r_k]
    wgh = kcols(Wgh, H)          # [H, K*2H]
    wux = kcols(Wux, H)          # [H, K*H]
    wuh = kcols(Wuh, H)          # [H, K*H]

    gate_w, upd_off, upd_w, total = _wx_layout(H, K)
    wx = jnp.zeros((H, total), jnp.float32)
    wx = wx.at[:, :gate_w].set(wgx)
    wx = wx.at[:, upd_off:upd_off + upd_w].set(wux)

    return dict(
        wx=wx.astype(MXU_DTYPE),
        wgh=wgh.astype(MXU_DTYPE),
        wuh=wuh.astype(MXU_DTYPE),
        bzr=p["b_gate"].reshape(1, 2 * H),           # [b_z | b_r]
        bu=p["b_upd"].reshape(1, H),
    )


def decoder_pallas(G, x_t, h_list, params):
    """Decoder forward.  G:[K,N,N], x_t:[B,N,C], h_list: L*[B,N,H].
    Returns (output [B,N,H], h_lst: L*[B,N,H])."""
    K, N, _ = G.shape
    B, _, C = x_t.shape
    H = h_list[0].shape[-1]
    L = len(params)
    BN = B * N
    assert C <= H, "decoder input dim must be <= hidden dim"
    # TODO(synk): generalize the zero-padding to max(C, H) if dim_out > dim_hidden.

    # Batch-block-diagonal supports so the kernel folds B into the matmul rows.
    # TODO(synk): for large B*N (v7x 64 MiB VMEM) keep G as [K,N,N] and apply it per
    # batch row-block (or row-tile Gbd via memory_space=pl.ANY + manual DMA).
    Gbd = jnp.einsum("ab,kij->kaibj",
                     jnp.eye(B, dtype=jnp.float32),
                     G.astype(jnp.float32)).reshape(K, BN, BN).astype(MXU_DTYPE)

    packed = [_pack_layer_weights(p, (C if i == 0 else H), H, K)
              for i, p in enumerate(params)]
    stack = lambda name: jnp.stack([q[name] for q in packed], axis=0)
    Wx, Wgh, Wuh = stack("wx"), stack("wgh"), stack("wuh")
    bzr, bu = stack("bzr"), stack("bu")

    # Zero-pad x along features to H and fold batch into rows.
    if C < H:
        x0 = jnp.concatenate([x_t, jnp.zeros((B, N, H - C), x_t.dtype)], axis=-1)
    else:
        x0 = x_t
    x0 = x0.reshape(BN, H).astype(jnp.float32)
    h_stack = jnp.stack([h.reshape(BN, H) for h in h_list], axis=0).astype(jnp.float32)

    kernel = _build_decoder_kernel(L, BN, H, K)
    vmem = lambda: pl.BlockSpec(memory_space=pltpu.MemorySpace.VMEM)

    h_all = pl.pallas_call(
        kernel,
        out_shape=jax.ShapeDtypeStruct((L, BN, H), jnp.float32),
        in_specs=[vmem() for _ in range(8)],
        out_specs=vmem(),
    )(x0, h_stack, Gbd, Wx, Wgh, Wuh, bzr, bu)

    h_all = h_all.reshape(L, B, N, H)
    h_lst = [h_all[i] for i in range(L)]
    return h_lst[-1], h_lst


# --------------------------------------------------------------------------
# Pure-JAX reference (mirrors the PyTorch module exactly) for verification
# --------------------------------------------------------------------------
def gcn_ref(G, x, W, b):
    supports = [jnp.einsum("ij,bjp->bip", G[k], x) for k in range(G.shape[0])]
    support_cat = jnp.concatenate(supports, axis=-1)
    return jnp.einsum("bip,pq->biq", support_cat, W) + b


def gru_cell_ref(G, x_t, h_pre, W_gate, b_gate, W_upd, b_upd, H):
    combined = jnp.concatenate([x_t, h_pre], axis=-1)
    z_r = jax.nn.sigmoid(gcn_ref(G, combined, W_gate, b_gate))
    z, r = z_r[..., :H], z_r[..., H:]
    candidate = jnp.concatenate([x_t, r * h_pre], axis=-1)
    n = jnp.tanh(gcn_ref(G, candidate, W_upd, b_upd))
    return z * n + (1.0 - z) * h_pre


def decoder_ref(G, x_t, h_list, params, H):
    current = x_t
    h_out = []
    for i, p in enumerate(params):
        h_t = gru_cell_ref(G, current, h_list[i],
                           p["W_gate"], p["b_gate"], p["W_upd"], p["b_upd"], H)
        h_out.append(h_t)
        current = h_t
    return current, h_out


# --------------------------------------------------------------------------
# Deterministic parameter init (xavier_normal_ for W, zeros for b)
# --------------------------------------------------------------------------
def xavier_normal(key, shape):
    fan_in, fan_out = shape
    std = math.sqrt(2.0 / (fan_in + fan_out))
    return std * jax.random.normal(key, shape, dtype=jnp.float32)


if __name__ == "__main__":
    K = 3            # cheb_k
    N = 16           # num_nodes
    B = 2            # batch
    C = 2            # dim_out (decoder feeds predictions back in)
    H = 32           # dim_hidden
    num_layers = 2

    key = jax.random.PRNGKey(0)
    kG, kx, kh, kp = jax.random.split(key, 4)

    G = jax.random.normal(kG, (K, N, N), dtype=jnp.float32) * 0.1
    x_t = jax.random.normal(kx, (B, N, C), dtype=jnp.float32)
    h_keys = jax.random.split(kh, num_layers)
    h_list = [jax.random.normal(h_keys[i], (B, N, H), dtype=jnp.float32)
              for i in range(num_layers)]

    params = []
    pkeys = jax.random.split(kp, num_layers * 2)
    for i in range(num_layers):
        din = C if i == 0 else H
        params.append({
            "W_gate": xavier_normal(pkeys[2 * i], (K * (din + H), 2 * H)),
            "b_gate": jnp.zeros((2 * H,), dtype=jnp.float32),
            "W_upd": xavier_normal(pkeys[2 * i + 1], (K * (din + H), H)),
            "b_upd": jnp.zeros((H,), dtype=jnp.float32),
        })

    # jit the whole wrapper so the weight repacking fuses with the single
    # pallas_call launch (one compiled unit for the full decoder step).
    decoder_jit = jax.jit(decoder_pallas)
    out, h_out = decoder_jit(G, x_t, h_list, params)
    out = jax.block_until_ready(out)
    h_out = [jax.block_until_ready(h) for h in h_out]

    out_ref, h_out_ref = decoder_ref(G, x_t, h_list, params, H)

    assert out.shape == (B, N, H)
    # Matmuls are reassociated ((G@X)@W -> G@(X@W)), so allow f32-MXU-level drift.
    np.testing.assert_allclose(np.asarray(out), np.asarray(out_ref),
                               rtol=1e-4, atol=1e-4)
    for a, b_ in zip(h_out, h_out_ref):
        np.testing.assert_allclose(np.asarray(a), np.asarray(b_),
                                   rtol=1e-4, atol=1e-4)

    print("KERNEL_OK")
</pallas_src>

<mosaic_0001>
module attributes {stable_mosaic.version = 11 : i64} {
  func.func @kernel(%arg0: memref<32x32xf32, #tpu.memory_space<vmem>>, %arg1: memref<2x32x32xf32, #tpu.memory_space<vmem>>, %arg2: memref<3x32x32xf32, #tpu.memory_space<vmem>>, %arg3: memref<2x32x384xf32, #tpu.memory_space<vmem>>, %arg4: memref<2x32x192xf32, #tpu.memory_space<vmem>>, %arg5: memref<2x32x96xf32, #tpu.memory_space<vmem>>, %arg6: memref<2x1x64xf32, #tpu.memory_space<vmem>>, %arg7: memref<2x1x32xf32, #tpu.memory_space<vmem>>, %arg8: memref<2x32x32xf32, #tpu.memory_space<vmem>>) attributes {dimension_semantics = [], scalar_prefetch = 0 : i64, scratch_operands = 0 : i64, tpu.core_type = #tpu.core_type<tc>} {
    %c0 = arith.constant 0 : index
    %c0_0 = arith.constant 0 : index
    %c0_1 = arith.constant 0 : index
    %0 = vector.load %arg2[%c0, %c0_0, %c0_1] : memref<3x32x32xf32, #tpu.memory_space<vmem>>, vector<1x32x32xf32>
    %1 = vector.shape_cast %0 : vector<1x32x32xf32> to vector<32x32xf32>
    %c1 = arith.constant 1 : index
    %c0_2 = arith.constant 0 : index
    %c0_3 = arith.constant 0 : index
    %2 = vector.load %arg2[%c1, %c0_2, %c0_3] : memref<3x32x32xf32, #tpu.memory_space<vmem>>, vector<1x32x32xf32>
    %3 = vector.shape_cast %2 : vector<1x32x32xf32> to vector<32x32xf32>
    %c2 = arith.constant 2 : index
    %c0_4 = arith.constant 0 : index
    %c0_5 = arith.constant 0 : index
    %4 = vector.load %arg2[%c2, %c0_4, %c0_5] : memref<3x32x32xf32, #tpu.memory_space<vmem>>, vector<1x32x32xf32>
    %5 = vector.shape_cast %4 : vector<1x32x32xf32> to vector<32x32xf32>
    %c0_6 = arith.constant 0 : index
    %c0_7 = arith.constant 0 : index
    %6 = vector.load %arg0[%c0_6, %c0_7] : memref<32x32xf32, #tpu.memory_space<vmem>>, vector<32x32xf32>
    %c0_8 = arith.constant 0 : index
    %c0_9 = arith.constant 0 : index
    %c0_10 = arith.constant 0 : index
    %7 = vector.load %arg1[%c0_8, %c0_9, %c0_10] : memref<2x32x32xf32, #tpu.memory_space<vmem>>, vector<1x32x32xf32>
    %8 = vector.shape_cast %7 : vector<1x32x32xf32> to vector<32x32xf32>
    %c0_11 = arith.constant 0 : index
    %c0_12 = arith.constant 0 : index
    %c0_13 = arith.constant 0 : index
    %9 = vector.load %arg3[%c0_11, %c0_12, %c0_13] : memref<2x32x384xf32, #tpu.memory_space<vmem>>, vector<1x32x384xf32>
    %10 = vector.shape_cast %9 : vector<1x32x384xf32> to vector<32x384xf32>
    %c0_14 = arith.constant 0 : index
    %c0_15 = arith.constant 0 : index
    %c0_16 = arith.constant 0 : index
    %11 = vector.load %arg4[%c0_14, %c0_15, %c0_16] : memref<2x32x192xf32, #tpu.memory_space<vmem>>, vector<1x32x192xf32>
    %12 = vector.shape_cast %11 : vector<1x32x192xf32> to vector<32x192xf32>
    %c0_17 = arith.constant 0 : index
    %c0_18 = arith.constant 0 : index
    %c0_19 = arith.constant 0 : index
    %13 = vector.load %arg5[%c0_17, %c0_18, %c0_19] : memref<2x32x96xf32, #tpu.memory_space<vmem>>, vector<1x32x96xf32>
    %14 = vector.shape_cast %13 : vector<1x32x96xf32> to vector<32x96xf32>
    %c0_20 = arith.constant 0 : index
    %c0_21 = arith.constant 0 : index
    %c0_22 = arith.constant 0 : index
    %15 = vector.load %arg6[%c0_20, %c0_21, %c0_22] : memref<2x1x64xf32, #tpu.memory_space<vmem>>, vector<1x1x64xf32>
    %16 = vector.shape_cast %15 : vector<1x1x64xf32> to vector<1x64xf32>
    %c0_23 = arith.constant 0 : index
    %c0_24 = arith.constant 0 : index
    %c0_25 = arith.constant 0 : index
    %17 = vector.load %arg7[%c0_23, %c0_24, %c0_25] : memref<2x1x32xf32, #tpu.memory_space<vmem>>, vector<1x1x32xf32>
    %18 = vector.shape_cast %17 : vector<1x1x32xf32> to vector<1x32xf32>
    %cst = arith.constant dense<0.000000e+00> : vector<32x384xf32>
    %19 = tpu.matmul %6, %10, %cst {dimension_numbers = #tpu.dot_dimension_numbers<[1], [0], [0], [1], [0, 0, 1, 1], [], []>} : vector<32x32xf32>, vector<32x384xf32>, vector<32x384xf32> -> vector<32x384xf32>
    %20 = vector.extract_strided_slice %19 {offsets = [0, 0], sizes = [32, 192], strides = [1, 1]} : vector<32x384xf32> to vector<32x192xf32>
    %cst_26 = arith.constant dense<0.000000e+00> : vector<32x192xf32>
    %21 = tpu.matmul %8, %12, %cst_26 {dimension_numbers = #tpu.dot_dimension_numbers<[1], [0], [0], [1], [0, 0, 1, 1], [], []>} : vector<32x32xf32>, vector<32x192xf32>, vector<32x192xf32> -> vector<32x192xf32>
    %22 = arith.addf %20, %21 : vector<32x192xf32>
    %23 = vector.extract_strided_slice %22 {offsets = [0, 0], sizes = [32, 64], strides = [1, 1]} : vector<32x192xf32> to vector<32x64xf32>
    %cst_27 = arith.constant dense<0.000000e+00> : vector<32x64xf32>
    %24 = tpu.matmul %1, %23, %cst_27 {dimension_numbers = #tpu.dot_dimension_numbers<[1], [0], [0], [1], [0, 0, 1, 1], [], []>} : vector<32x32xf32>, vector<32x64xf32>, vector<32x64xf32> -> vector<32x64xf32>
    %25 = vector.broadcast %16 : vector<1x64xf32> to vector<32x64xf32>
    %26 = arith.addf %25, %24 : vector<32x64xf32>
    %27 = vector.extract_strided_slice %22 {offsets = [0, 64], sizes = [32, 64], strides = [1, 1]} : vector<32x192xf32> to vector<32x64xf32>
    %cst_28 = arith.constant dense<0.000000e+00> : vector<32x64xf32>
    %28 = tpu.matmul %3, %27, %cst_28 {dimension_numbers = #tpu.dot_dimension_numbers<[1], [0], [0], [1], [0, 0, 1, 1], [], []>} : vector<32x32xf32>, vector<32x64xf32>, vector<32x64xf32> -> vector<32x64xf32>
    %29 = arith.addf %26, %28 : vector<32x64xf32>
    %30 = vector.extract_strided_slice %22 {offsets = [0, 128], sizes = [32, 64], strides = [1, 1]} : vector<32x192xf32> to vector<32x64xf32>
    %cst_29 = arith.constant dense<0.000000e+00> : vector<32x64xf32>
    %31 = tpu.matmul %5, %30, %cst_29 {dimension_numbers = #tpu.dot_dimension_numbers<[1], [0], [0], [1], [0, 0, 1, 1], [], []>} : vector<32x32xf32>, vector<32x64xf32>, vector<32x64xf32> -> vector<32x64xf32>
    %32 = arith.addf %29, %31 : vector<32x64xf32>
    %33 = arith.negf %32 : vector<32x64xf32>
    %34 = math.exp %33 : vector<32x64xf32>
    %cst_30 = arith.constant 1.000000e+00 : f32
    %35 = vector.broadcast %cst_30 : f32 to vector<32x64xf32>
    %36 = arith.addf %35, %34 : vector<32x64xf32>
    %37 = arith.divf %35, %36 : vector<32x64xf32>
    %38 = vector.extract_strided_slice %37 {offsets = [0, 0], sizes = [32, 32], strides = [1, 1]} : vector<32x64xf32> to vector<32x32xf32>
    %39 = vector.extract_strided_slice %37 {offsets = [0, 32], sizes = [32, 32], strides = [1, 1]} : vector<32x64xf32> to vector<32x32xf32>
    %40 = arith.mulf %39, %8 : vector<32x32xf32>
    %41 = vector.extract_strided_slice %19 {offsets = [0, 256], sizes = [32, 96], strides = [1, 1]} : vector<32x384xf32> to vector<32x96xf32>
    %cst_31 = arith.constant dense<0.000000e+00> : vector<32x96xf32>
    %42 = tpu.matmul %40, %14, %cst_31 {dimension_numbers = #tpu.dot_dimension_numbers<[1], [0], [0], [1], [0, 0, 1, 1], [], []>} : vector<32x32xf32>, vector<32x96xf32>, vector<32x96xf32> -> vector<32x96xf32>
    %43 = arith.addf %41, %42 : vector<32x96xf32>
    %44 = vector.extract_strided_slice %43 {offsets = [0, 0], sizes = [32, 32], strides = [1, 1]} : vector<32x96xf32> to vector<32x32xf32>
    %cst_32 = arith.constant dense<0.000000e+00> : vector<32x32xf32>
    %45 = tpu.matmul %1, %44, %cst_32 {dimension_numbers = #tpu.dot_dimension_numbers<[1], [0], [0], [1], [0, 0, 1, 1], [], []>} : vector<32x32xf32>, vector<32x32xf32>, vector<32x32xf32> -> vector<32x32xf32>
    %46 = vector.broadcast %18 : vector<1x32xf32> to vector<32x32xf32>
    %47 = arith.addf %46, %45 : vector<32x32xf32>
    %48 = vector.extract_strided_slice %43 {offsets = [0, 32], sizes = [32, 32], strides = [1, 1]} : vector<32x96xf32> to vector<32x32xf32>
    %cst_33 = arith.constant dense<0.000000e+00> : vector<32x32xf32>
    %49 = tpu.matmul %3, %48, %cst_33 {dimension_numbers = #tpu.dot_dimension_numbers<[1], [0], [0], [1], [0, 0, 1, 1], [], []>} : vector<32x32xf32>, vector<32x32xf32>, vector<32x32xf32> -> vector<32x32xf32>
    %50 = arith.addf %47, %49 : vector<32x32xf32>
    %51 = vector.extract_strided_slice %43 {offsets = [0, 64], sizes = [32, 32], strides = [1, 1]} : vector<32x96xf32> to vector<32x32xf32>
    %cst_34 = arith.constant dense<0.000000e+00> : vector<32x32xf32>
    %52 = tpu.matmul %5, %51, %cst_34 {dimension_numbers = #tpu.dot_dimension_numbers<[1], [0], [0], [1], [0, 0, 1, 1], [], []>} : vector<32x32xf32>, vector<32x32xf32>, vector<32x32xf32> -> vector<32x32xf32>
    %53 = arith.addf %50, %52 : vector<32x32xf32>
    %54 = math.tanh %53 : vector<32x32xf32>
    %55 = arith.mulf %38, %54 : vector<32x32xf32>
    %cst_35 = arith.constant 1.000000e+00 : f32
    %56 = vector.broadcast %cst_35 : f32 to vector<32x32xf32>
    %57 = arith.subf %56, %38 : vector<32x32xf32>
    %58 = arith.mulf %57, %8 : vector<32x32xf32>
    %59 = arith.addf %55, %58 : vector<32x32xf32>
    %c0_36 = arith.constant 0 : index
    %c0_37 = arith.constant 0 : index
    %c0_38 = arith.constant 0 : index
    %60 = vector.load %arg8[%c0_36, %c0_37, %c0_38] : memref<2x32x32xf32, #tpu.memory_space<vmem>>, vector<1x32x32xf32>
    %61 = vector.shape_cast %60 : vector<1x32x32xf32> to vector<32x32xf32>
    %62 = vector.shape_cast %59 : vector<32x32xf32> to vector<1x32x32xf32>
    tpu.vector_store %arg8[%c0_36, %c0_37, %c0_38], %62 {strides = array<i32>} : memref<2x32x32xf32, #tpu.memory_space<vmem>>, vector<1x32x32xf32>,
    %c1_39 = arith.constant 1 : index
    %c0_40 = arith.constant 0 : index
    %c0_41 = arith.constant 0 : index
    %63 = vector.load %arg1[%c1_39, %c0_40, %c0_41] : memref<2x32x32xf32, #tpu.memory_space<vmem>>, vector<1x32x32xf32>
    %64 = vector.shape_cast %63 : vector<1x32x32xf32> to vector<32x32xf32>
    %c1_42 = arith.constant 1 : index
    %c0_43 = arith.constant 0 : index
    %c0_44 = arith.constant 0 : index
    %65 = vector.load %arg3[%c1_42, %c0_43, %c0_44] : memref<2x32x384xf32, #tpu.memory_space<vmem>>, vector<1x32x384xf32>
    %66 = vector.shape_cast %65 : vector<1x32x384xf32> to vector<32x384xf32>
    %c1_45 = arith.constant 1 : index
    %c0_46 = arith.constant 0 : index
    %c0_47 = arith.constant 0 : index
    %67 = vector.load %arg4[%c1_45, %c0_46, %c0_47] : memref<2x32x192xf32, #tpu.memory_space<vmem>>, vector<1x32x192xf32>
    %68 = vector.shape_cast %67 : vector<1x32x192xf32> to vector<32x192xf32>
    %c1_48 = arith.constant 1 : index
    %c0_49 = arith.constant 0 : index
    %c0_50 = arith.constant 0 : index
    %69 = vector.load %arg5[%c1_48, %c0_49, %c0_50] : memref<2x32x96xf32, #tpu.memory_space<vmem>>, vector<1x32x96xf32>
    %70 = vector.shape_cast %69 : vector<1x32x96xf32> to vector<32x96xf32>
    %c1_51 = arith.constant 1 : index
    %c0_52 = arith.constant 0 : index
    %c0_53 = arith.constant 0 : index
    %71 = vector.load %arg6[%c1_51, %c0_52, %c0_53] : memref<2x1x64xf32, #tpu.memory_space<vmem>>, vector<1x1x64xf32>
    %72 = vector.shape_cast %71 : vector<1x1x64xf32> to vector<1x64xf32>
    %c1_54 = arith.constant 1 : index
    %c0_55 = arith.constant 0 : index
    %c0_56 = arith.constant 0 : index
    %73 = vector.load %arg7[%c1_54, %c0_55, %c0_56] : memref<2x1x32xf32, #tpu.memory_space<vmem>>, vector<1x1x32xf32>
    %74 = vector.shape_cast %73 : vector<1x1x32xf32> to vector<1x32xf32>
    %cst_57 = arith.constant dense<0.000000e+00> : vector<32x384xf32>
    %75 = tpu.matmul %59, %66, %cst_57 {dimension_numbers = #tpu.dot_dimension_numbers<[1], [0], [0], [1], [0, 0, 1, 1], [], []>} : vector<32x32xf32>, vector<32x384xf32>, vector<32x384xf32> -> vector<32x384xf32>
    %76 = vector.extract_strided_slice %75 {offsets = [0, 0], sizes = [32, 192], strides = [1, 1]} : vector<32x384xf32> to vector<32x192xf32>
    %cst_58 = arith.constant dense<0.000000e+00> : vector<32x192xf32>
    %77 = tpu.matmul %64, %68, %cst_58 {dimension_numbers = #tpu.dot_dimension_numbers<[1], [0], [0], [1], [0, 0, 1, 1], [], []>} : vector<32x32xf32>, vector<32x192xf32>, vector<32x192xf32> -> vector<32x192xf32>
    %78 = arith.addf %76, %77 : vector<32x192xf32>
    %79 = vector.extract_strided_slice %78 {offsets = [0, 0], sizes = [32, 64], strides = [1, 1]} : vector<32x192xf32> to vector<32x64xf32>
    %cst_59 = arith.constant dense<0.000000e+00> : vector<32x64xf32>
    %80 = tpu.matmul %1, %79, %cst_59 {dimension_numbers = #tpu.dot_dimension_numbers<[1], [0], [0], [1], [0, 0, 1, 1], [], []>} : vector<32x32xf32>, vector<32x64xf32>, vector<32x64xf32> -> vector<32x64xf32>
    %81 = vector.broadcast %72 : vector<1x64xf32> to vector<32x64xf32>
    %82 = arith.addf %81, %80 : vector<32x64xf32>
    %83 = vector.extract_strided_slice %78 {offsets = [0, 64], sizes = [32, 64], strides = [1, 1]} : vector<32x192xf32> to vector<32x64xf32>
    %cst_60 = arith.constant dense<0.000000e+00> : vector<32x64xf32>
    %84 = tpu.matmul %3, %83, %cst_60 {dimension_numbers = #tpu.dot_dimension_numbers<[1], [0], [0], [1], [0, 0, 1, 1], [], []>} : vector<32x32xf32>, vector<32x64xf32>, vector<32x64xf32> -> vector<32x64xf32>
    %85 = arith.addf %82, %84 : vector<32x64xf32>
    %86 = vector.extract_strided_slice %78 {offsets = [0, 128], sizes = [32, 64], strides = [1, 1]} : vector<32x192xf32> to vector<32x64xf32>
    %cst_61 = arith.constant dense<0.000000e+00> : vector<32x64xf32>
    %87 = tpu.matmul %5, %86, %cst_61 {dimension_numbers = #tpu.dot_dimension_numbers<[1], [0], [0], [1], [0, 0, 1, 1], [], []>} : vector<32x32xf32>, vector<32x64xf32>, vector<32x64xf32> -> vector<32x64xf32>
    %88 = arith.addf %85, %87 : vector<32x64xf32>
    %89 = arith.negf %88 : vector<32x64xf32>
    %90 = math.exp %89 : vector<32x64xf32>
    %cst_62 = arith.constant 1.000000e+00 : f32
    %91 = vector.broadcast %cst_62 : f32 to vector<32x64xf32>
    %92 = arith.addf %91, %90 : vector<32x64xf32>
    %93 = arith.divf %91, %92 : vector<32x64xf32>
    %94 = vector.extract_strided_slice %93 {offsets = [0, 0], sizes = [32, 32], strides = [1, 1]} : vector<32x64xf32> to vector<32x32xf32>
    %95 = vector.extract_strided_slice %93 {offsets = [0, 32], sizes = [32, 32], strides = [1, 1]} : vector<32x64xf32> to vector<32x32xf32>
    %96 = arith.mulf %95, %64 : vector<32x32xf32>
    %97 = vector.extract_strided_slice %75 {offsets = [0, 256], sizes = [32, 96], strides = [1, 1]} : vector<32x384xf32> to vector<32x96xf32>
    %cst_63 = arith.constant dense<0.000000e+00> : vector<32x96xf32>
    %98 = tpu.matmul %96, %70, %cst_63 {dimension_numbers = #tpu.dot_dimension_numbers<[1], [0], [0], [1], [0, 0, 1, 1], [], []>} : vector<32x32xf32>, vector<32x96xf32>, vector<32x96xf32> -> vector<32x96xf32>
    %99 = arith.addf %97, %98 : vector<32x96xf32>
    %100 = vector.extract_strided_slice %99 {offsets = [0, 0], sizes = [32, 32], strides = [1, 1]} : vector<32x96xf32> to vector<32x32xf32>
    %cst_64 = arith.constant dense<0.000000e+00> : vector<32x32xf32>
    %101 = tpu.matmul %1, %100, %cst_64 {dimension_numbers = #tpu.dot_dimension_numbers<[1], [0], [0], [1], [0, 0, 1, 1], [], []>} : vector<32x32xf32>, vector<32x32xf32>, vector<32x32xf32> -> vector<32x32xf32>
    %102 = vector.broadcast %74 : vector<1x32xf32> to vector<32x32xf32>
    %103 = arith.addf %102, %101 : vector<32x32xf32>
    %104 = vector.extract_strided_slice %99 {offsets = [0, 32], sizes = [32, 32], strides = [1, 1]} : vector<32x96xf32> to vector<32x32xf32>
    %cst_65 = arith.constant dense<0.000000e+00> : vector<32x32xf32>
    %105 = tpu.matmul %3, %104, %cst_65 {dimension_numbers = #tpu.dot_dimension_numbers<[1], [0], [0], [1], [0, 0, 1, 1], [], []>} : vector<32x32xf32>, vector<32x32xf32>, vector<32x32xf32> -> vector<32x32xf32>
    %106 = arith.addf %103, %105 : vector<32x32xf32>
    %107 = vector.extract_strided_slice %99 {offsets = [0, 64], sizes = [32, 32], strides = [1, 1]} : vector<32x96xf32> to vector<32x32xf32>
    %cst_66 = arith.constant dense<0.000000e+00> : vector<32x32xf32>
    %108 = tpu.matmul %5, %107, %cst_66 {dimension_numbers = #tpu.dot_dimension_numbers<[1], [0], [0], [1], [0, 0, 1, 1], [], []>} : vector<32x32xf32>, vector<32x32xf32>, vector<32x32xf32> -> vector<32x32xf32>
    %109 = arith.addf %106, %108 : vector<32x32xf32>
    %110 = math.tanh %109 : vector<32x32xf32>
    %111 = arith.mulf %94, %110 : vector<32x32xf32>
    %cst_67 = arith.constant 1.000000e+00 : f32
    %112 = vector.broadcast %cst_67 : f32 to vector<32x32xf32>
    %113 = arith.subf %112, %94 : vector<32x32xf32>
    %114 = arith.mulf %113, %64 : vector<32x32xf32>
    %115 = arith.addf %111, %114 : vector<32x32xf32>
    %c1_68 = arith.constant 1 : index
    %c0_69 = arith.constant 0 : index
    %c0_70 = arith.constant 0 : index
    %116 = vector.load %arg8[%c1_68, %c0_69, %c0_70] : memref<2x32x32xf32, #tpu.memory_space<vmem>>, vector<1x32x32xf32>
    %117 = vector.shape_cast %116 : vector<1x32x32xf32> to vector<32x32xf32>
    %118 = vector.shape_cast %115 : vector<32x32xf32> to vector<1x32x32xf32>
    tpu.vector_store %arg8[%c1_68, %c0_69, %c0_70], %118 {strides = array<i32>} : memref<2x32x32xf32, #tpu.memory_space<vmem>>, vector<1x32x32xf32>,
    return
  }
}

</mosaic_0001>

<llo_original>
// kernel: decoder_pallas.1
$region0: #{decoder_pallas.1}
  #allocation0 [shape = 'u32[]', space=smem, size = 0x4, offset = 0x4, fixed_abs, tag = 'smem constant byte address 0x4 - core index']
  #allocation1 [shape = 'u32[144,128]{1,0:T(1,128)}', space=vmem, size = 0x12000, scoped, tag = 'internal scratch']
  %s0 = inlined_call_operand.vmem [shape: f32[32,32], index: 0, kind: input, shape index: {}]
  %s1 = inlined_call_operand.vmem [shape: f32[2,32,32], index: 1, kind: input, shape index: {}]
  %s2 = inlined_call_operand.vmem [shape: f32[3,32,32], index: 2, kind: input, shape index: {}]
  %s3 = inlined_call_operand.vmem [shape: f32[2,32,384], index: 3, kind: input, shape index: {}]
  %s4 = inlined_call_operand.vmem [shape: f32[2,32,192], index: 4, kind: input, shape index: {}]
  %s5 = inlined_call_operand.vmem [shape: f32[2,32,96], index: 5, kind: input, shape index: {}]
  %s6 = inlined_call_operand.vmem [shape: f32[2,1,64], index: 6, kind: input, shape index: {}]
  %s7 = inlined_call_operand.vmem [shape: f32[2,1,32], index: 7, kind: input, shape index: {}]
  %s8 = inlined_call_operand.vmem [shape: f32[2,32,32], index: 8, kind: output, shape index: {}]
  %s9 = sld [smem:[#allocation0]]
  $region42: #{decoder_pallas.1} parent=0
    _
  %s11 = ssub.s32 1, %s9
  %s12 = scalar_select 0, %s11, %s9
  // Predicated region
  $region2: #{decoder_pallas.1} parent=0 // pred_check
    _
  $region3: #{decoder_pallas.1} parent=0 // pred_check_branch
    %14 = sbr.rel (0) target = $region5
  $region4: #{decoder_pallas.1} parent=0 // pred_region
    _
  $region5: #{decoder_pallas.1} parent=0 // pred_fallthru
    _
  // Predicated region
  $region6: #{decoder_pallas.1} parent=0 // pred_check
    _
  $region7: #{decoder_pallas.1} parent=0 // pred_check_branch
    %16 = sbr.rel (0) target = $region9
  $region8: #{decoder_pallas.1} parent=0 // pred_region
    _
  $region9: #{decoder_pallas.1} parent=0 // pred_fallthru
    _
  // Predicated region
  $region10: #{decoder_pallas.1} parent=0 // pred_check
    _
  $region11: #{decoder_pallas.1} parent=0 // pred_check_branch
    %18 = sbr.rel (0) target = $region13
  $region12: #{decoder_pallas.1} parent=0 // pred_region
    _
  $region13: #{decoder_pallas.1} parent=0 // pred_fallthru
    _
  // Predicated region
  $region14: #{decoder_pallas.1} parent=0 // pred_check
    _
  $region15: #{decoder_pallas.1} parent=0 // pred_check_branch
    %20 = sbr.rel (0) target = $region17
  $region16: #{decoder_pallas.1} parent=0 // pred_region
    _
  $region17: #{decoder_pallas.1} parent=0 // pred_fallthru
    _
  // Predicated region
  $region18: #{decoder_pallas.1} parent=0 // pred_check
    _
  $region19: #{decoder_pallas.1} parent=0 // pred_check_branch
    %22 = sbr.rel (0) target = $region21
  $region20: #{decoder_pallas.1} parent=0 // pred_region
    _
  $region21: #{decoder_pallas.1} parent=0 // pred_fallthru
    _
  // Predicated region
  $region22: #{decoder_pallas.1} parent=0 // pred_check
    _
  $region23: #{decoder_pallas.1} parent=0 // pred_check_branch
    %24 = sbr.rel (0) target = $region25
  $region24: #{decoder_pallas.1} parent=0 // pred_region
    _
  $region25: #{decoder_pallas.1} parent=0 // pred_fallthru
    _
  // Predicated region
  $region26: #{decoder_pallas.1} parent=0 // pred_check
    _
  $region27: #{decoder_pallas.1} parent=0 // pred_check_branch
    %26 = sbr.rel (0) target = $region29
  $region28: #{decoder_pallas.1} parent=0 // pred_region
    _
  $region29: #{decoder_pallas.1} parent=0 // pred_fallthru
    _
  // Predicated region
  $region30: #{decoder_pallas.1} parent=0 // pred_check
    _
  $region31: #{decoder_pallas.1} parent=0 // pred_check_branch
    %28 = sbr.rel (0) target = $region33
  $region32: #{decoder_pallas.1} parent=0 // pred_region
    _
  $region33: #{decoder_pallas.1} parent=0 // pred_fallthru
    _
  %v29 = vld [vmem:[%s2] sm:$0xff]
  %v30 = vld [vmem:[%s2 + $0x8] sm:$0xff]
  %v31 = vld [vmem:[%s2 + $0x10] sm:$0xff]
  %v32 = vld [vmem:[%s2 + $0x18] sm:$0xff]
  %s33 = scalar_lea.vmem %s2, 32
  %v34 = vld [vmem:[%s33] sm:$0xff]
  %v35 = vld [vmem:[%s33 + $0x8] sm:$0xff]
  %v36 = vld [vmem:[%s33 + $0x10] sm:$0xff]
  %v37 = vld [vmem:[%s33 + $0x18] sm:$0xff]
  %s38 = scalar_lea.vmem %s2, 64
  %v39 = vld [vmem:[%s38] sm:$0xff]
  %v40 = vld [vmem:[%s38 + $0x8] sm:$0xff]
  %v41 = vld [vmem:[%s38 + $0x10] sm:$0xff]
  %v42 = vld [vmem:[%s38 + $0x18] sm:$0xff]
  %v43 = vld [vmem:[%s0] sm:$0xff]
  %v44 = vld [vmem:[%s0 + $0x8] sm:$0xff]
  %v45 = vld [vmem:[%s0 + $0x10] sm:$0xff]
  %v46 = vld [vmem:[%s0 + $0x18] sm:$0xff]
  %v47 = vld [vmem:[%s1] sm:$0xff]
  %v48 = vld [vmem:[%s1 + $0x8] sm:$0xff]
  %v49 = vld [vmem:[%s1 + $0x10] sm:$0xff]
  %v50 = vld [vmem:[%s1 + $0x18] sm:$0xff]
  %v51 = vld [vmem:[%s3] sm:$0xff]
  %v52 = vld [vmem:[%s3 + $0x8] sm:$0xff]
  %v53 = vld [vmem:[%s3 + $0x10] sm:$0xff]
  %v54 = vld [vmem:[%s3 + $0x18] sm:$0xff]
  %v55 = vld [vmem:[%s3 + $0x20] sm:$0xff]
  %v56 = vld [vmem:[%s3 + $0x28] sm:$0xff]
  %v57 = vld [vmem:[%s3 + $0x30] sm:$0xff]
  %v58 = vld [vmem:[%s3 + $0x38] sm:$0xff]
  %v59 = vld [vmem:[%s3 + $0x40] sm:$0xff]
  %v60 = vld [vmem:[%s3 + $0x48] sm:$0xff]
  %v61 = vld [vmem:[%s3 + $0x50] sm:$0xff]
  %v62 = vld [vmem:[%s3 + $0x58] sm:$0xff]
  %v63 = vld [vmem:[%s4] sm:$0xff]
  %v64 = vld [vmem:[%s4 + $0x8] sm:$0xff]
  %v65 = vld [vmem:[%s4 + $0x10] sm:$0xff]
  %v66 = vld [vmem:[%s4 + $0x18] sm:$0xff]
  %v67 = vld [vmem:[%s4 + $0x20] sm:$0xff]
  %v68 = vld [vmem:[%s4 + $0x28] sm:$0xff]
  %v69 = vld [vmem:[%s4 + $0x30] sm:$0xff]
  %v70 = vld [vmem:[%s4 + $0x38] sm:$0xff]
  %v71 = vld [vmem:[%s5] sm:$0xff]
  %v72 = vld [vmem:[%s5 + $0x8] sm:$0xff]
  %v73 = vld [vmem:[%s5 + $0x10] sm:$0xff]
  %v74 = vld [vmem:[%s5 + $0x18] sm:$0xff]
  %v75 = vld [vmem:[%s6] sm:$0x1]
  %v76 = vld [vmem:[%s7] sm:$0x1]
  %vm77 = vcmask 261120
  %v79 = vsel %vm77, %v43, 0
  %v82 = vsel %vm77, %v44, 0
  %v85 = vsel %vm77, %v45, 0
  %v88 = vsel %vm77, %v46, 0
  %90 = vmatprep.subr.mxu0 %v52
  %91 = vmatpush1.msra.mxu0 %v51
  %92 = vmatprep.subr.mxu0 %v55
  %93 = vmatpush1.msra.mxu0 %v54
  %94 = vmatprep.subr.mxu0 %v58
  %95 = vmatpush1.msra.mxu0 %v57
  %96 = vmatprep.subr.mxu0 %v61
  %97 = vmatpush1.msra.mxu0 %v60
  %98 = vmatprep.subr.mxu0 0.0
  %99 = vmatpush1.msra.mxu0 0.0
  %100 = vmatprep.subr.mxu0 0.0
  %101 = vmatpush1.msra.mxu0 0.0
  %102 = vmatprep.subr.mxu0 0.0
  %103 = vmatpush1.msra.mxu0 0.0
  %104 = vmatprep.subr.mxu0 0.0
  %105 = vmatpush1.msra.mxu0 0.0
  %106 = vmatprep.subr.mxu0 0.0
  %107 = vmatpush1.msra.mxu0 0.0
  %108 = vmatprep.subr.mxu0 0.0
  %109 = vmatpush1.msra.mxu0 0.0
  %110 = vmatprep.subr.mxu0 0.0
  %111 = vmatpush1.msra.mxu0 0.0
  %112 = vmatprep.subr.mxu0 0.0
  %113 = vmatpush1.msra.mxu0 0.0
  %114 = vmatprep.subr.mxu0 0.0
  %115 = vmatpush1.msra.mxu0 0.0
  %116 = vmatprep.subr.mxu0 0.0
  %117 = vmatpush1.msra.mxu0 0.0
  %118 = vmatprep.subr.mxu0 0.0
  %119 = vmatpush1.msra.mxu0 0.0
  %120 = vmatprep.subr.mxu0 0.0
  %121 = vmatpush1.msra.mxu0 0.0
  %122 = vmatprep.subr.mxu0 0.0
  %123 = vmatpush1.msra.mxu0 0.0
  %124 = vmatprep.subr.mxu0 0.0
  %125 = vmatpush1.msra.mxu0 0.0
  %126 = vmatprep.subr.mxu0 0.0
  %127 = vmatpush1.msra.mxu0 0.0
  %128 = vmatprep.subr.mxu0 0.0
  %129 = vmatpush1.msra.mxu0 0.0
  %130 = vmatprep.subr.mxu0 0.0
  %131 = vmatpush1.msra.mxu0 0.0
  %132 = vmatprep.subr.mxu0 0.0
  %133 = vmatpush1.msra.mxu0 0.0
  %134 = vmatprep.subr.mxu0 0.0
  %135 = vmatpush1.msra.mxu0 0.0
  %136 = vmatprep.subr.mxu0 0.0
  %137 = vmatpush1.msra.mxu0 0.0
  %138 = vmatprep.subr.mxu0 0.0
  %139 = vmatpush1.msra.mxu0 0.0
  %140 = vmatprep.subr.mxu0 0.0
  %141 = vmatpush1.msra.mxu0 0.0
  %142 = vmatprep.subr.mxu0 0.0
  %143 = vmatpush1.msra.mxu0 0.0
  %144 = vmatprep.subr.mxu0 0.0
  %145 = vmatpush1.msra.mxu0 0.0
  %146 = vmatprep.subr.mxu0 0.0
  %147 = vmatpush1.msra.mxu0 0.0
  %148 = vmatprep.subr.mxu0 0.0
  %149 = vmatpush1.msra.mxu0 0.0
  %150 = vmatprep.subr.mxu0 0.0
  %151 = vmatpush1.msra.mxu0 0.0
  %152 = vmatprep.subr.mxu0 0.0
  %153 = vmatpush1.msra.mxu0 0.0
  %154 = vmatprep.mubr.f32.mxu0 0.0
  %155 = vmatmul.mubr.f32.gmra.mrb[0].mxu0 %v79
  %v156 = vpop.f32.mrb[0].mxu0
  %v157 = vadd.f32 0.0, %v156
  %v158 = vpop.f32.mrb[0].mxu0
  %v159 = vadd.f32 0.0, %v158
  %160 = vmatprep.mubr.f32.mxu0 0.0
  %161 = vmatmul.mubr.f32.gmra.mrb[0].mxu0 %v82
  %v162 = vpop.f32.mrb[0].mxu0
  %v163 = vadd.f32 0.0, %v162
  %v164 = vpop.f32.mrb[0].mxu0
  %v165 = vadd.f32 0.0, %v164
  %166 = vmatprep.mubr.f32.mxu0 0.0
  %167 = vmatmul.mubr.f32.gmra.mrb[0].mxu0 %v85
  %v168 = vpop.f32.mrb[0].mxu0
  %v169 = vadd.f32 0.0, %v168
  %v170 = vpop.f32.mrb[0].mxu0
  %v171 = vadd.f32 0.0, %v170
  %172 = vmatprep.mubr.f32.mxu0 0.0
  %173 = vmatmul.mubr.f32.gmra.mrb[0].mxu0 %v88
  %v174 = vpop.f32.mrb[0].mxu0
  %v175 = vadd.f32 0.0, %v174
  %v176 = vpop.f32.mrb[0].mxu0
  %v177 = vadd.f32 0.0, %v176
  %178 = vdwg.mxu0
  %179 = vmatprep.subr.mxu0 0.0
  %180 = vmatpush1.msra.mxu0 %v53
  %181 = vmatprep.subr.mxu0 0.0
  %182 = vmatpush1.msra.mxu0 %v56
  %183 = vmatprep.subr.mxu0 0.0
  %184 = vmatpush1.msra.mxu0 %v59
  %185 = vmatprep.subr.mxu0 0.0
  %186 = vmatpush1.msra.mxu0 %v62
  %187 = vmatprep.subr.mxu0 0.0
  %188 = vmatpush1.msra.mxu0 0.0
  %189 = vmatprep.subr.mxu0 0.0
  %190 = vmatpush1.msra.mxu0 0.0
  %191 = vmatprep.subr.mxu0 0.0
  %192 = vmatpush1.msra.mxu0 0.0
  %193 = vmatprep.subr.mxu0 0.0
  %194 = vmatpush1.msra.mxu0 0.0
  %195 = vmatprep.subr.mxu0 0.0
  %196 = vmatpush1.msra.mxu0 0.0
  %197 = vmatprep.subr.mxu0 0.0
  %198 = vmatpush1.msra.mxu0 0.0
  %199 = vmatprep.subr.mxu0 0.0
  %200 = vmatpush1.msra.mxu0 0.0
  %201 = vmatprep.subr.mxu0 0.0
  %202 = vmatpush1.msra.mxu0 0.0
  %203 = vmatprep.subr.mxu0 0.0
  %204 = vmatpush1.msra.mxu0 0.0
  %205 = vmatprep.subr.mxu0 0.0
  %206 = vmatpush1.msra.mxu0 0.0
  %207 = vmatprep.subr.mxu0 0.0
  %208 = vmatpush1.msra.mxu0 0.0
  %209 = vmatprep.subr.mxu0 0.0
  %210 = vmatpush1.msra.mxu0 0.0
  %211 = vmatprep.subr.mxu0 0.0
  %212 = vmatpush1.msra.mxu0 0.0
  %213 = vmatprep.subr.mxu0 0.0
  %214 = vmatpush1.msra.mxu0 0.0
  %215 = vmatprep.subr.mxu0 0.0
  %216 = vmatpush1.msra.mxu0 0.0
  %217 = vmatprep.subr.mxu0 0.0
  %218 = vmatpush1.msra.mxu0 0.0
  %219 = vmatprep.subr.mxu0 0.0
  %220 = vmatpush1.msra.mxu0 0.0
  %221 = vmatprep.subr.mxu0 0.0
  %222 = vmatpush1.msra.mxu0 0.0
  %223 = vmatprep.subr.mxu0 0.0
  %224 = vmatpush1.msra.mxu0 0.0
  %225 = vmatprep.subr.mxu0 0.0
  %226 = vmatpush1.msra.mxu0 0.0
  %227 = vmatprep.subr.mxu0 0.0
  %228 = vmatpush1.msra.mxu0 0.0
  %229 = vmatprep.subr.mxu0 0.0
  %230 = vmatpush1.msra.mxu0 0.0
  %231 = vmatprep.subr.mxu0 0.0
  %232 = vmatpush1.msra.mxu0 0.0
  %233 = vmatprep.subr.mxu0 0.0
  %234 = vmatpush1.msra.mxu0 0.0
  %235 = vmatprep.subr.mxu0 0.0
  %236 = vmatpush1.msra.mxu0 0.0
  %237 = vmatprep.subr.mxu0 0.0
  %238 = vmatpush1.msra.mxu0 0.0
  %239 = vmatprep.subr.mxu0 0.0
  %240 = vmatpush1.msra.mxu0 0.0
  %241 = vmatprep.subr.mxu0 0.0
  %242 = vmatpush1.msra.mxu0 0.0
  %243 = vmatprep.mubr.f32.mxu0 0.0
  %244 = vmatmul.mubr.f32.gmra.mrb[0].mxu0 %v79
  %v245 = vpop.f32.mrb[0].mxu0
  %v246 = vadd.f32 0.0, %v245
  %v247 = vpop.f32.mrb[0].mxu0
  %248 = vmatprep.mubr.f32.mxu0 0.0
  %249 = vmatmul.mubr.f32.gmra.mrb[0].mxu0 %v82
  %v250 = vpop.f32.mrb[0].mxu0
  %v251 = vadd.f32 0.0, %v250
  %v252 = vpop.f32.mrb[0].mxu0
  %253 = vmatprep.mubr.f32.mxu0 0.0
  %254 = vmatmul.mubr.f32.gmra.mrb[0].mxu0 %v85
  %v255 = vpop.f32.mrb[0].mxu0
  %v256 = vadd.f32 0.0, %v255
  %v257 = vpop.f32.mrb[0].mxu0
  %258 = vmatprep.mubr.f32.mxu0 0.0
  %259 = vmatmul.mubr.f32.gmra.mrb[0].mxu0 %v88
  %v260 = vpop.f32.mrb[0].mxu0
  %v261 = vadd.f32 0.0, %v260
  %v262 = vpop.f32.mrb[0].mxu0
  %263 = vdwg.mxu0
  %v265 = vsel %vm77, %v47, 0
  %v268 = vsel %vm77, %v48, 0
  %v271 = vsel %vm77, %v49, 0
  %v274 = vsel %vm77, %v50, 0
  %276 = vmatprep.subr.mxu0 %v64
  %277 = vmatpush1.msra.mxu0 %v63
  %278 = vmatprep.subr.mxu0 %v66
  %279 = vmatpush1.msra.mxu0 %v65
  %280 = vmatprep.subr.mxu0 %v68
  %281 = vmatpush1.msra.mxu0 %v67
  %282 = vmatprep.subr.mxu0 %v70
  %283 = vmatpush1.msra.mxu0 %v69
  %284 = vmatprep.subr.mxu0 0.0
  %285 = vmatpush1.msra.mxu0 0.0
  %286 = vmatprep.subr.mxu0 0.0
  %287 = vmatpush1.msra.mxu0 0.0
  %288 = vmatprep.subr.mxu0 0.0
  %289 = vmatpush1.msra.mxu0 0.0
  %290 = vmatprep.subr.mxu0 0.0
  %291 = vmatpush1.msra.mxu0 0.0
  %292 = vmatprep.subr.mxu0 0.0
  %293 = vmatpush1.msra.mxu0 0.0
  %294 = vmatprep.subr.mxu0 0.0
  %295 = vmatpush1.msra.mxu0 0.0
  %296 = vmatprep.subr.mxu0 0.0
  %297 = vmatpush1.msra.mxu0 0.0
  %298 = vmatprep.subr.mxu0 0.0
  %299 = vmatpush1.msra.mxu0 0.0
  %300 = vmatprep.subr.mxu0 0.0
  %301 = vmatpush1.msra.mxu0 0.0
  %302 = vmatprep.subr.mxu0 0.0
  %303 = vmatpush1.msra.mxu0 0.0
  %304 = vmatprep.subr.mxu0 0.0
  %305 = vmatpush1.msra.mxu0 0.0
  %306 = vmatprep.subr.mxu0 0.0
  %307 = vmatpush1.msra.mxu0 0.0
  %308 = vmatprep.subr.mxu0 0.0
  %309 = vmatpush1.msra.mxu0 0.0
  %310 = vmatprep.subr.mxu0 0.0
  %311 = vmatpush1.msra.mxu0 0.0
  %312 = vmatprep.subr.mxu0 0.0
  %313 = vmatpush1.msra.mxu0 0.0
  %314 = vmatprep.subr.mxu0 0.0
  %315 = vmatpush1.msra.mxu0 0.0
  %316 = vmatprep.subr.mxu0 0.0
  %317 = vmatpush1.msra.mxu0 0.0
  %318 = vmatprep.subr.mxu0 0.0
  %319 = vmatpush1.msra.mxu0 0.0
  %320 = vmatprep.subr.mxu0 0.0
  %321 = vmatpush1.msra.mxu0 0.0
  %322 = vmatprep.subr.mxu0 0.0
  %323 = vmatpush1.msra.mxu0 0.0
  %324 = vmatprep.subr.mxu0 0.0
  %325 = vmatpush1.msra.mxu0 0.0
  %326 = vmatprep.subr.mxu0 0.0
  %327 = vmatpush1.msra.mxu0 0.0
  %328 = vmatprep.subr.mxu0 0.0
  %329 = vmatpush1.msra.mxu0 0.0
  %330 = vmatprep.subr.mxu0 0.0
  %331 = vmatpush1.msra.mxu0 0.0
  %332 = vmatprep.subr.mxu0 0.0
  %333 = vmatpush1.msra.mxu0 0.0
  %334 = vmatprep.subr.mxu0 0.0
  %335 = vmatpush1.msra.mxu0 0.0
  %336 = vmatprep.subr.mxu0 0.0
  %337 = vmatpush1.msra.mxu0 0.0
  %338 = vmatprep.subr.mxu0 0.0
  %339 = vmatpush1.msra.mxu0 0.0
  %340 = vmatprep.mubr.f32.mxu0 0.0
  %341 = vmatmul.mubr.f32.gmra.mrb[0].mxu0 %v265
  %v342 = vpop.f32.mrb[0].mxu0
  %v343 = vadd.f32 0.0, %v342
  %v344 = vpop.f32.mrb[0].mxu0
  %v345 = vadd.f32 0.0, %v344
  %346 = vmatprep.mubr.f32.mxu0 0.0
  %347 = vmatmul.mubr.f32.gmra.mrb[0].mxu0 %v268
  %v348 = vpop.f32.mrb[0].mxu0
  %v349 = vadd.f32 0.0, %v348
  %v350 = vpop.f32.mrb[0].mxu0
  %v351 = vadd.f32 0.0, %v350
  %352 = vmatprep.mubr.f32.mxu0 0.0
  %353 = vmatmul.mubr.f32.gmra.mrb[0].mxu0 %v271
  %v354 = vpop.f32.mrb[0].mxu0
  %v355 = vadd.f32 0.0, %v354
  %v356 = vpop.f32.mrb[0].mxu0
  %v357 = vadd.f32 0.0, %v356
  %358 = vmatprep.mubr.f32.mxu0 0.0
  %359 = vmatmul.mubr.f32.gmra.mrb[0].mxu0 %v274
  %v360 = vpop.f32.mrb[0].mxu0
  %v361 = vadd.f32 0.0, %v360
  %v362 = vpop.f32.mrb[0].mxu0
  %v363 = vadd.f32 0.0, %v362
  %364 = vdwg.mxu0
  %v365 = vadd.f32 %v157, %v343
  %v366 = vadd.f32 %v159, %v345
  %v367 = vadd.f32 %v163, %v349
  %v368 = vadd.f32 %v165, %v351
  %v369 = vadd.f32 %v169, %v355
  %v370 = vadd.f32 %v171, %v357
  %v371 = vadd.f32 %v175, %v361
  %v372 = vadd.f32 %v177, %v363
  %v374 = vsel %vm77, %v29, 0
  %v377 = vsel %vm77, %v30, 0
  %v380 = vsel %vm77, %v31, 0
  %v383 = vsel %vm77, %v32, 0
  %385 = vmatprep.subr.mxu0 0.0
  %386 = vmatpush1.msra.mxu0 %v365
  %387 = vmatprep.subr.mxu0 0.0
  %388 = vmatpush1.msra.mxu0 %v367
  %389 = vmatprep.subr.mxu0 0.0
  %390 = vmatpush1.msra.mxu0 %v369
  %391 = vmatprep.subr.mxu0 0.0
  %392 = vmatpush1.msra.mxu0 %v371
  %393 = vmatprep.subr.mxu0 0.0
  %394 = vmatpush1.msra.mxu0 0.0
  %395 = vmatprep.subr.mxu0 0.0
  %396 = vmatpush1.msra.mxu0 0.0
  %397 = vmatprep.subr.mxu0 0.0
  %398 = vmatpush1.msra.mxu0 0.0
  %399 = vmatprep.subr.mxu0 0.0
  %400 = vmatpush1.msra.mxu0 0.0
  %401 = vmatprep.subr.mxu0 0.0
  %402 = vmatpush1.msra.mxu0 0.0
  %403 = vmatprep.subr.mxu0 0.0
  %404 = vmatpush1.msra.mxu0 0.0
  %405 = vmatprep.subr.mxu0 0.0
  %406 = vmatpush1.msra.mxu0 0.0
  %407 = vmatprep.subr.mxu0 0.0
  %408 = vmatpush1.msra.mxu0 0.0
  %409 = vmatprep.subr.mxu0 0.0
  %410 = vmatpush1.msra.mxu0 0.0
  %411 = vmatprep.subr.mxu0 0.0
  %412 = vmatpush1.msra.mxu0 0.0
  %413 = vmatprep.subr.mxu0 0.0
  %414 = vmatpush1.msra.mxu0 0.0
  %415 = vmatprep.subr.mxu0 0.0
  %416 = vmatpush1.msra.mxu0 0.0
  %417 = vmatprep.subr.mxu0 0.0
  %418 = vmatpush1.msra.mxu0 0.0
  %419 = vmatprep.subr.mxu0 0.0
  %420 = vmatpush1.msra.mxu0 0.0
  %421 = vmatprep.subr.mxu0 0.0
  %422 = vmatpush1.msra.mxu0 0.0
  %423 = vmatprep.subr.mxu0 0.0
  %424 = vmatpush1.msra.mxu0 0.0
  %425 = vmatprep.subr.mxu0 0.0
  %426 = vmatpush1.msra.mxu0 0.0
  %427 = vmatprep.subr.mxu0 0.0
  %428 = vmatpush1.msra.mxu0 0.0
  %429 = vmatprep.subr.mxu0 0.0
  %430 = vmatpush1.msra.mxu0 0.0
  %431 = vmatprep.subr.mxu0 0.0
  %432 = vmatpush1.msra.mxu0 0.0
  %433 = vmatprep.subr.mxu0 0.0
  %434 = vmatpush1.msra.mxu0 0.0
  %435 = vmatprep.subr.mxu0 0.0
  %436 = vmatpush1.msra.mxu0 0.0
  %437 = vmatprep.subr.mxu0 0.0
  %438 = vmatpush1.msra.mxu0 0.0
  %439 = vmatprep.subr.mxu0 0.0
  %440 = vmatpush1.msra.mxu0 0.0
  %441 = vmatprep.subr.mxu0 0.0
  %442 = vmatpush1.msra.mxu0 0.0
  %443 = vmatprep.subr.mxu0 0.0
  %444 = vmatpush1.msra.mxu0 0.0
  %445 = vmatprep.subr.mxu0 0.0
  %446 = vmatpush1.msra.mxu0 0.0
  %447 = vmatprep.subr.mxu0 0.0
  %448 = vmatpush1.msra.mxu0 0.0
  %449 = vmatprep.mubr.f32.mxu0 0.0
  %450 = vmatmul.mubr.f32.gmra.mrb[0].mxu0 %v374
  %v451 = vpop.f32.mrb[0].mxu0
  %v452 = vadd.f32 0.0, %v451
  %v453 = vpop.f32.mrb[0].mxu0
  %454 = vmatprep.mubr.f32.mxu0 0.0
  %455 = vmatmul.mubr.f32.gmra.mrb[0].mxu0 %v377
  %v456 = vpop.f32.mrb[0].mxu0
  %v457 = vadd.f32 0.0, %v456
  %v458 = vpop.f32.mrb[0].mxu0
  %459 = vmatprep.mubr.f32.mxu0 0.0
  %460 = vmatmul.mubr.f32.gmra.mrb[0].mxu0 %v380
  %v461 = vpop.f32.mrb[0].mxu0
  %v462 = vadd.f32 0.0, %v461
  %v463 = vpop.f32.mrb[0].mxu0
  %464 = vmatprep.mubr.f32.mxu0 0.0
  %465 = vmatmul.mubr.f32.gmra.mrb[0].mxu0 %v383
  %v466 = vpop.f32.mrb[0].mxu0
  %v467 = vadd.f32 0.0, %v466
  %v468 = vpop.f32.mrb[0].mxu0
  %469 = vdwg.mxu0
  %v471 = vlaneseq
  %v472 = vshrl.u32 %v471, 7
  %v473 = vsub.s32 0, %v472
  %v474 = vrot.slane %v75, %v473
  %v476 = vadd.f32 %v474, %v452
  %v477 = vadd.f32 %v474, %v457
  %v478 = vadd.f32 %v474, %v462
  %v479 = vadd.f32 %v474, %v467
  %484 = vrot.lane.b32.xlu0 %v365, 64
  %v485 = vpop.permute.xlu0 %484
  %486 = vrot.lane.b32.xlu0 %v367, 64
  %v487 = vpop.permute.xlu0 %486
  %488 = vrot.lane.b32.xlu0 %v369, 64
  %v489 = vpop.permute.xlu0 %488
  %490 = vrot.lane.b32.xlu0 %v371, 64
  %v491 = vpop.permute.xlu0 %490
  %v497 = vsel %vm77, %v34, 0
  %v500 = vsel %vm77, %v35, 0
  %v503 = vsel %vm77, %v36, 0
  %v506 = vsel %vm77, %v37, 0
  %508 = vmatprep.subr.mxu0 0.0
  %509 = vmatpush1.msra.mxu0 %v485
  %510 = vmatprep.subr.mxu0 0.0
  %511 = vmatpush1.msra.mxu0 %v487
  %512 = vmatprep.subr.mxu0 0.0
  %513 = vmatpush1.msra.mxu0 %v489
  %514 = vmatprep.subr.mxu0 0.0
  %515 = vmatpush1.msra.mxu0 %v491
  %516 = vmatprep.subr.mxu0 0.0
  %517 = vmatpush1.msra.mxu0 0.0
  %518 = vmatprep.subr.mxu0 0.0
  %519 = vmatpush1.msra.mxu0 0.0
  %520 = vmatprep.subr.mxu0 0.0
  %521 = vmatpush1.msra.mxu0 0.0
  %522 = vmatprep.subr.mxu0 0.0
  %523 = vmatpush1.msra.mxu0 0.0
  %524 = vmatprep.subr.mxu0 0.0
  %525 = vmatpush1.msra.mxu0 0.0
  %526 = vmatprep.subr.mxu0 0.0
  %527 = vmatpush1.msra.mxu0 0.0
  %528 = vmatprep.subr.mxu0 0.0
  %529 = vmatpush1.msra.mxu0 0.0
  %530 = vmatprep.subr.mxu0 0.0
  %531 = vmatpush1.msra.mxu0 0.0
  %532 = vmatprep.subr.mxu0 0.0
  %533 = vmatpush1.msra.mxu0 0.0
  %534 = vmatprep.subr.mxu0 0.0
  %535 = vmatpush1.msra.mxu0 0.0
  %536 = vmatprep.subr.mxu0 0.0
  %537 = vmatpush1.msra.mxu0 0.0
  %538 = vmatprep.subr.mxu0 0.0
  %539 = vmatpush1.msra.mxu0 0.0
  %540 = vmatprep.subr.mxu0 0.0
  %541 = vmatpush1.msra.mxu0 0.0
  %542 = vmatprep.subr.mxu0 0.0
  %543 = vmatpush1.msra.mxu0 0.0
  %544 = vmatprep.subr.mxu0 0.0
  %545 = vmatpush1.msra.mxu0 0.0
  %546 = vmatprep.subr.mxu0 0.0
  %547 = vmatpush1.msra.mxu0 0.0
  %548 = vmatprep.subr.mxu0 0.0
  %549 = vmatpush1.msra.mxu0 0.0
  %550 = vmatprep.subr.mxu0 0.0
  %551 = vmatpush1.msra.mxu0 0.0
  %552 = vmatprep.subr.mxu0 0.0
  %553 = vmatpush1.msra.mxu0 0.0
  %554 = vmatprep.subr.mxu0 0.0
  %555 = vmatpush1.msra.mxu0 0.0
  %556 = vmatprep.subr.mxu0 0.0
  %557 = vmatpush1.msra.mxu0 0.0
  %558 = vmatprep.subr.mxu0 0.0
  %559 = vmatpush1.msra.mxu0 0.0
  %560 = vmatprep.subr.mxu0 0.0
  %561 = vmatpush1.msra.mxu0 0.0
  %562 = vmatprep.subr.mxu0 0.0
  %563 = vmatpush1.msra.mxu0 0.0
  %564 = vmatprep.subr.mxu0 0.0
  %565 = vmatpush1.msra.mxu0 0.0
  %566 = vmatprep.subr.mxu0 0.0
  %567 = vmatpush1.msra.mxu0 0.0
  %568 = vmatprep.subr.mxu0 0.0
  %569 = vmatpush1.msra.mxu0 0.0
  %570 = vmatprep.subr.mxu0 0.0
  %571 = vmatpush1.msra.mxu0 0.0
  %572 = vmatprep.mubr.f32.mxu0 0.0
  %573 = vmatmul.mubr.f32.gmra.mrb[0].mxu0 %v497
  %v574 = vpop.f32.mrb[0].mxu0
  %v575 = vadd.f32 0.0, %v574
  %v576 = vpop.f32.mrb[0].mxu0
  %577 = vmatprep.mubr.f32.mxu0 0.0
  %578 = vmatmul.mubr.f32.gmra.mrb[0].mxu0 %v500
  %v579 = vpop.f32.mrb[0].mxu0
  %v580 = vadd.f32 0.0, %v579
  %v581 = vpop.f32.mrb[0].mxu0
  %582 = vmatprep.mubr.f32.mxu0 0.0
  %583 = vmatmul.mubr.f32.gmra.mrb[0].mxu0 %v503
  %v584 = vpop.f32.mrb[0].mxu0
  %v585 = vadd.f32 0.0, %v584
  %v586 = vpop.f32.mrb[0].mxu0
  %587 = vmatprep.mubr.f32.mxu0 0.0
  %588 = vmatmul.mubr.f32.gmra.mrb[0].mxu0 %v506
  %v589 = vpop.f32.mrb[0].mxu0
  %v590 = vadd.f32 0.0, %v589
  %v591 = vpop.f32.mrb[0].mxu0
  %592 = vdwg.mxu0
  %v593 = vadd.f32 %v476, %v575
  %v594 = vadd.f32 %v477, %v580
  %v595 = vadd.f32 %v478, %v585
  %v596 = vadd.f32 %v479, %v590
  %v598 = vsel %vm77, %v39, 0
  %v601 = vsel %vm77, %v40, 0
  %v604 = vsel %vm77, %v41, 0
  %v607 = vsel %vm77, %v42, 0
  %609 = vmatprep.subr.mxu0 0.0
  %610 = vmatpush1.msra.mxu0 %v366
  %611 = vmatprep.subr.mxu0 0.0
  %612 = vmatpush1.msra.mxu0 %v368
  %613 = vmatprep.subr.mxu0 0.0
  %614 = vmatpush1.msra.mxu0 %v370
  %615 = vmatprep.subr.mxu0 0.0
  %616 = vmatpush1.msra.mxu0 %v372
  %617 = vmatprep.subr.mxu0 0.0
  %618 = vmatpush1.msra.mxu0 0.0
  %619 = vmatprep.subr.mxu0 0.0
  %620 = vmatpush1.msra.mxu0 0.0
  %621 = vmatprep.subr.mxu0 0.0
  %622 = vmatpush1.msra.mxu0 0.0
  %623 = vmatprep.subr.mxu0 0.0
  %624 = vmatpush1.msra.mxu0 0.0
  %625 = vmatprep.subr.mxu0 0.0
  %626 = vmatpush1.msra.mxu0 0.0
  %627 = vmatprep.subr.mxu0 0.0
  %628 = vmatpush1.msra.mxu0 0.0
  %629 = vmatprep.subr.mxu0 0.0
  %630 = vmatpush1.msra.mxu0 0.0
  %631 = vmatprep.subr.mxu0 0.0
  %632 = vmatpush1.msra.mxu0 0.0
  %633 = vmatprep.subr.mxu0 0.0
  %634 = vmatpush1.msra.mxu0 0.0
  %635 = vmatprep.subr.mxu0 0.0
  %636 = vmatpush1.msra.mxu0 0.0
  %637 = vmatprep.subr.mxu0 0.0
  %638 = vmatpush1.msra.mxu0 0.0
  %639 = vmatprep.subr.mxu0 0.0
  %640 = vmatpush1.msra.mxu0 0.0
  %641 = vmatprep.subr.mxu0 0.0
  %642 = vmatpush1.msra.mxu0 0.0
  %643 = vmatprep.subr.mxu0 0.0
  %644 = vmatpush1.msra.mxu0 0.0
  %645 = vmatprep.subr.mxu0 0.0
  %646 = vmatpush1.msra.mxu0 0.0
  %647 = vmatprep.subr.mxu0 0.0
  %648 = vmatpush1.msra.mxu0 0.0
  %649 = vmatprep.subr.mxu0 0.0
  %650 = vmatpush1.msra.mxu0 0.0
  %651 = vmatprep.subr.mxu0 0.0
  %652 = vmatpush1.msra.mxu0 0.0
  %653 = vmatprep.subr.mxu0 0.0
  %654 = vmatpush1.msra.mxu0 0.0
  %655 = vmatprep.subr.mxu0 0.0
  %656 = vmatpush1.msra.mxu0 0.0
  %657 = vmatprep.subr.mxu0 0.0
  %658 = vmatpush1.msra.mxu0 0.0
  %659 = vmatprep.subr.mxu0 0.0
  %660 = vmatpush1.msra.mxu0 0.0
  %661 = vmatprep.subr.mxu0 0.0
  %662 = vmatpush1.msra.mxu0 0.0
  %663 = vmatprep.subr.mxu0 0.0
  %664 = vmatpush1.msra.mxu0 0.0
  %665 = vmatprep.subr.mxu0 0.0
  %666 = vmatpush1.msra.mxu0 0.0
  %667 = vmatprep.subr.mxu0 0.0
  %668 = vmatpush1.msra.mxu0 0.0
  %669 = vmatprep.subr.mxu0 0.0
  %670 = vmatpush1.msra.mxu0 0.0
  %671 = vmatprep.subr.mxu0 0.0
  %672 = vmatpush1.msra.mxu0 0.0
  %673 = vmatprep.mubr.f32.mxu0 0.0
  %674 = vmatmul.mubr.f32.gmra.mrb[0].mxu0 %v598
  %v675 = vpop.f32.mrb[0].mxu0
  %v676 = vadd.f32 0.0, %v675
  %v677 = vpop.f32.mrb[0].mxu0
  %678 = vmatprep.mubr.f32.mxu0 0.0
  %679 = vmatmul.mubr.f32.gmra.mrb[0].mxu0 %v601
  %v680 = vpop.f32.mrb[0].mxu0
  %v681 = vadd.f32 0.0, %v680
  %v682 = vpop.f32.mrb[0].mxu0
  %683 = vmatprep.mubr.f32.mxu0 0.0
  %684 = vmatmul.mubr.f32.gmra.mrb[0].mxu0 %v604
  %v685 = vpop.f32.mrb[0].mxu0
  %v686 = vadd.f32 0.0, %v685
  %v687 = vpop.f32.mrb[0].mxu0
  %688 = vmatprep.mubr.f32.mxu0 0.0
  %689 = vmatmul.mubr.f32.gmra.mrb[0].mxu0 %v607
  %v690 = vpop.f32.mrb[0].mxu0
  %v691 = vadd.f32 0.0, %v690
  %v692 = vpop.f32.mrb[0].mxu0
  %693 = vdwg.mxu0
  %v694 = vadd.f32 %v593, %v676
  %v695 = vadd.f32 %v594, %v681
  %v696 = vadd.f32 %v595, %v686
  %v697 = vadd.f32 %v596, %v691
  %v698 = vxor.u32 %v694, 2147483648
  %v699 = vxor.u32 %v695, 2147483648
  %v700 = vxor.u32 %v696, 2147483648
  %v701 = vxor.u32 %v697, 2147483648
  %v702 = vmul.f32 %v698, 1.442695
  %v703 = vpow.pop %v702
  %v704 = vmul.f32 %v699, 1.442695
  %v705 = vpow.pop %v704
  %v706 = vmul.f32 %v700, 1.442695
  %v707 = vpow.pop %v706
  %v708 = vmul.f32 %v701, 1.442695
  %v709 = vpow.pop %v708
  %v710 = vadd.f32 %v703, 1.0
  %v711 = vadd.f32 %v705, 1.0
  %v712 = vadd.f32 %v707, 1.0
  %v713 = vadd.f32 %v709, 1.0
  %v714 = vrcp.pop %v710
  %v715 = vmul.f32 1.0, %v714
  %v716 = vrcp.pop %v711
  %v717 = vmul.f32 1.0, %v716
  %v718 = vrcp.pop %v712
  %v719 = vmul.f32 1.0, %v718
  %v720 = vrcp.pop %v713
  %v721 = vmul.f32 1.0, %v720
  %722 = vrot.lane.b32.xlu0 %v47, 32
  %v723 = vpop.permute.xlu0 %722
  %724 = vrot.lane.b32.xlu0 %v48, 32
  %v725 = vpop.permute.xlu0 %724
  %726 = vrot.lane.b32.xlu0 %v49, 32
  %v727 = vpop.permute.xlu0 %726
  %728 = vrot.lane.b32.xlu0 %v50, 32
  %v729 = vpop.permute.xlu0 %728
  %v734 = vmul.f32 %v715, %v723
  %v735 = vmul.f32 %v717, %v725
  %v736 = vmul.f32 %v719, %v727
  %v737 = vmul.f32 %v721, %v729
  %742 = vrot.lane.b32.xlu0 %v734, 96
  %v743 = vpop.permute.xlu0 %742
  %744 = vrot.lane.b32.xlu0 %v735, 96
  %v745 = vpop.permute.xlu0 %744
  %746 = vrot.lane.b32.xlu0 %v736, 96
  %v747 = vpop.permute.xlu0 %746
  %748 = vrot.lane.b32.xlu0 %v737, 96
  %v749 = vpop.permute.xlu0 %748
  %v750 = vsel %vm77, %v743, 0
  %v752 = vsel %vm77, %v745, 0
  %v754 = vsel %vm77, %v747, 0
  %v756 = vsel %vm77, %v749, 0
  %758 = vmatprep.subr.mxu0 0.0
  %759 = vmatpush1.msra.mxu0 %v71
  %760 = vmatprep.subr.mxu0 0.0
  %761 = vmatpush1.msra.mxu0 %v72
  %762 = vmatprep.subr.mxu0 0.0
  %763 = vmatpush1.msra.mxu0 %v73
  %764 = vmatprep.subr.mxu0 0.0
  %765 = vmatpush1.msra.mxu0 %v74
  %766 = vmatprep.subr.mxu0 0.0
  %767 = vmatpush1.msra.mxu0 0.0
  %768 = vmatprep.subr.mxu0 0.0
  %769 = vmatpush1.msra.mxu0 0.0
  %770 = vmatprep.subr.mxu0 0.0
  %771 = vmatpush1.msra.mxu0 0.0
  %772 = vmatprep.subr.mxu0 0.0
  %773 = vmatpush1.msra.mxu0 0.0
  %774 = vmatprep.subr.mxu0 0.0
  %775 = vmatpush1.msra.mxu0 0.0
  %776 = vmatprep.subr.mxu0 0.0
  %777 = vmatpush1.msra.mxu0 0.0
  %778 = vmatprep.subr.mxu0 0.0
  %779 = vmatpush1.msra.mxu0 0.0
  %780 = vmatprep.subr.mxu0 0.0
  %781 = vmatpush1.msra.mxu0 0.0
  %782 = vmatprep.subr.mxu0 0.0
  %783 = vmatpush1.msra.mxu0 0.0
  %784 = vmatprep.subr.mxu0 0.0
  %785 = vmatpush1.msra.mxu0 0.0
  %786 = vmatprep.subr.mxu0 0.0
  %787 = vmatpush1.msra.mxu0 0.0
  %788 = vmatprep.subr.mxu0 0.0
  %789 = vmatpush1.msra.mxu0 0.0
  %790 = vmatprep.subr.mxu0 0.0
  %791 = vmatpush1.msra.mxu0 0.0
  %792 = vmatprep.subr.mxu0 0.0
  %793 = vmatpush1.msra.mxu0 0.0
  %794 = vmatprep.subr.mxu0 0.0
  %795 = vmatpush1.msra.mxu0 0.0
  %796 = vmatprep.subr.mxu0 0.0
  %797 = vmatpush1.msra.mxu0 0.0
  %798 = vmatprep.subr.mxu0 0.0
  %799 = vmatpush1.msra.mxu0 0.0
  %800 = vmatprep.subr.mxu0 0.0
  %801 = vmatpush1.msra.mxu0 0.0
  %802 = vmatprep.subr.mxu0 0.0
  %803 = vmatpush1.msra.mxu0 0.0
  %804 = vmatprep.subr.mxu0 0.0
  %805 = vmatpush1.msra.mxu0 0.0
  %806 = vmatprep.subr.mxu0 0.0
  %807 = vmatpush1.msra.mxu0 0.0
  %808 = vmatprep.subr.mxu0 0.0
  %809 = vmatpush1.msra.mxu0 0.0
  %810 = vmatprep.subr.mxu0 0.0
  %811 = vmatpush1.msra.mxu0 0.0
  %812 = vmatprep.subr.mxu0 0.0
  %813 = vmatpush1.msra.mxu0 0.0
  %814 = vmatprep.subr.mxu0 0.0
  %815 = vmatpush1.msra.mxu0 0.0
  %816 = vmatprep.subr.mxu0 0.0
  %817 = vmatpush1.msra.mxu0 0.0
  %818 = vmatprep.subr.mxu0 0.0
  %819 = vmatpush1.msra.mxu0 0.0
  %820 = vmatprep.subr.mxu0 0.0
  %821 = vmatpush1.msra.mxu0 0.0
  %822 = vmatprep.mubr.f32.mxu0 0.0
  %823 = vmatmul.mubr.f32.gmra.mrb[0].mxu0 %v750
  %v824 = vpop.f32.mrb[0].mxu0
  %v825 = vadd.f32 0.0, %v824
  %v826 = vpop.f32.mrb[0].mxu0
  %827 = vmatprep.mubr.f32.mxu0 0.0
  %828 = vmatmul.mubr.f32.gmra.mrb[0].mxu0 %v752
  %v829 = vpop.f32.mrb[0].mxu0
  %v830 = vadd.f32 0.0, %v829
  %v831 = vpop.f32.mrb[0].mxu0
  %832 = vmatprep.mubr.f32.mxu0 0.0
  %833 = vmatmul.mubr.f32.gmra.mrb[0].mxu0 %v754
  %v834 = vpop.f32.mrb[0].mxu0
  %v835 = vadd.f32 0.0, %v834
  %v836 = vpop.f32.mrb[0].mxu0
  %837 = vmatprep.mubr.f32.mxu0 0.0
  %838 = vmatmul.mubr.f32.gmra.mrb[0].mxu0 %v756
  %v839 = vpop.f32.mrb[0].mxu0
  %v840 = vadd.f32 0.0, %v839
  %v841 = vpop.f32.mrb[0].mxu0
  %842 = vdwg.mxu0
  %v843 = vadd.f32 %v246, %v825
  %v844 = vadd.f32 %v251, %v830
  %v845 = vadd.f32 %v256, %v835
  %v846 = vadd.f32 %v261, %v840
  %847 = vmatprep.subr.mxu0 0.0
  %848 = vmatpush1.msra.mxu0 %v843
  %849 = vmatprep.subr.mxu0 0.0
  %850 = vmatpush1.msra.mxu0 %v844
  %851 = vmatprep.subr.mxu0 0.0
  %852 = vmatpush1.msra.mxu0 %v845
  %853 = vmatprep.subr.mxu0 0.0
  %854 = vmatpush1.msra.mxu0 %v846
  %855 = vmatprep.subr.mxu0 0.0
  %856 = vmatpush1.msra.mxu0 0.0
  %857 = vmatprep.subr.mxu0 0.0
  %858 = vmatpush1.msra.mxu0 0.0
  %859 = vmatprep.subr.mxu0 0.0
  %860 = vmatpush1.msra.mxu0 0.0
  %861 = vmatprep.subr.mxu0 0.0
  %862 = vmatpush1.msra.mxu0 0.0
  %863 = vmatprep.subr.mxu0 0.0
  %864 = vmatpush1.msra.mxu0 0.0
  %865 = vmatprep.subr.mxu0 0.0
  %866 = vmatpush1.msra.mxu0 0.0
  %867 = vmatprep.subr.mxu0 0.0
  %868 = vmatpush1.msra.mxu0 0.0
  %869 = vmatprep.subr.mxu0 0.0
  %870 = vmatpush1.msra.mxu0 0.0
  %871 = vmatprep.subr.mxu0 0.0
  %872 = vmatpush1.msra.mxu0 0.0
  %873 = vmatprep.subr.mxu0 0.0
  %874 = vmatpush1.msra.mxu0 0.0
  %875 = vmatprep.subr.mxu0 0.0
  %876 = vmatpush1.msra.mxu0 0.0
  %877 = vmatprep.subr.mxu0 0.0
  %878 = vmatpush1.msra.mxu0 0.0
  %879 = vmatprep.subr.mxu0 0.0
  %880 = vmatpush1.msra.mxu0 0.0
  %881 = vmatprep.subr.mxu0 0.0
  %882 = vmatpush1.msra.mxu0 0.0
  %883 = vmatprep.subr.mxu0 0.0
  %884 = vmatpush1.msra.mxu0 0.0
  %885 = vmatprep.subr.mxu0 0.0
  %886 = vmatpush1.msra.mxu0 0.0
  %887 = vmatprep.subr.mxu0 0.0
  %888 = vmatpush1.msra.mxu0 0.0
  %889 = vmatprep.subr.mxu0 0.0
  %890 = vmatpush1.msra.mxu0 0.0
  %891 = vmatprep.subr.mxu0 0.0
  %892 = vmatpush1.msra.mxu0 0.0
  %893 = vmatprep.subr.mxu0 0.0
  %894 = vmatpush1.msra.mxu0 0.0
  %895 = vmatprep.subr.mxu0 0.0
  %896 = vmatpush1.msra.mxu0 0.0
  %897 = vmatprep.subr.mxu0 0.0
  %898 = vmatpush1.msra.mxu0 0.0
  %899 = vmatprep.subr.mxu0 0.0
  %900 = vmatpush1.msra.mxu0 0.0
  %901 = vmatprep.subr.mxu0 0.0
  %902 = vmatpush1.msra.mxu0 0.0
  %903 = vmatprep.subr.mxu0 0.0
  %904 = vmatpush1.msra.mxu0 0.0
  %905 = vmatprep.subr.mxu0 0.0
  %906 = vmatpush1.msra.mxu0 0.0
  %907 = vmatprep.subr.mxu0 0.0
  %908 = vmatpush1.msra.mxu0 0.0
  %909 = vmatprep.subr.mxu0 0.0
  %910 = vmatpush1.msra.mxu0 0.0
  %911 = vmatprep.mubr.f32.mxu0 0.0
  %912 = vmatmul.mubr.f32.gmra.mrb[0].mxu0 %v374
  %v913 = vpop.f32.mrb[0].mxu0
  %v914 = vadd.f32 0.0, %v913
  %v915 = vpop.f32.mrb[0].mxu0
  %916 = vmatprep.mubr.f32.mxu0 0.0
  %917 = vmatmul.mubr.f32.gmra.mrb[0].mxu0 %v377
  %v918 = vpop.f32.mrb[0].mxu0
  %v919 = vadd.f32 0.0, %v918
  %v920 = vpop.f32.mrb[0].mxu0
  %921 = vmatprep.mubr.f32.mxu0 0.0
  %922 = vmatmul.mubr.f32.gmra.mrb[0].mxu0 %v380
  %v923 = vpop.f32.mrb[0].mxu0
  %v924 = vadd.f32 0.0, %v923
  %v925 = vpop.f32.mrb[0].mxu0
  %926 = vmatprep.mubr.f32.mxu0 0.0
  %927 = vmatmul.mubr.f32.gmra.mrb[0].mxu0 %v383
  %v928 = vpop.f32.mrb[0].mxu0
  %v929 = vadd.f32 0.0, %v928
  %v930 = vpop.f32.mrb[0].mxu0
  %931 = vdwg.mxu0
  %v933 = vlaneseq
  %v934 = vshrl.u32 %v933, 7
  %v935 = vsub.s32 0, %v934
  %v936 = vrot.slane %v76, %v935
  %v938 = vadd.f32 %v936, %v914
  %v939 = vadd.f32 %v936, %v919
  %v940 = vadd.f32 %v936, %v924
  %v941 = vadd.f32 %v936, %v929
  %946 = vrot.lane.b32.xlu0 %v843, 96
  %v947 = vpop.permute.xlu0 %946
  %948 = vrot.lane.b32.xlu0 %v844, 96
  %v949 = vpop.permute.xlu0 %948
  %950 = vrot.lane.b32.xlu0 %v845, 96
  %v951 = vpop.permute.xlu0 %950
  %952 = vrot.lane.b32.xlu0 %v846, 96
  %v953 = vpop.permute.xlu0 %952
  %958 = vmatprep.subr.mxu0 0.0
  %959 = vmatpush1.msra.mxu0 %v947
  %960 = vmatprep.subr.mxu0 0.0
  %961 = vmatpush1.msra.mxu0 %v949
  %962 = vmatprep.subr.mxu0 0.0
  %963 = vmatpush1.msra.mxu0 %v951
  %964 = vmatprep.subr.mxu0 0.0
  %965 = vmatpush1.msra.mxu0 %v953
  %966 = vmatprep.subr.mxu0 0.0
  %967 = vmatpush1.msra.mxu0 0.0
  %968 = vmatprep.subr.mxu0 0.0
  %969 = vmatpush1.msra.mxu0 0.0
  %970 = vmatprep.subr.mxu0 0.0
  %971 = vmatpush1.msra.mxu0 0.0
  %972 = vmatprep.subr.mxu0 0.0
  %973 = vmatpush1.msra.mxu0 0.0
  %974 = vmatprep.subr.mxu0 0.0
  %975 = vmatpush1.msra.mxu0 0.0
  %976 = vmatprep.subr.mxu0 0.0
  %977 = vmatpush1.msra.mxu0 0.0
  %978 = vmatprep.subr.mxu0 0.0
  %979 = vmatpush1.msra.mxu0 0.0
  %980 = vmatprep.subr.mxu0 0.0
  %981 = vmatpush1.msra.mxu0 0.0
  %982 = vmatprep.subr.mxu0 0.0
  %983 = vmatpush1.msra.mxu0 0.0
  %984 = vmatprep.subr.mxu0 0.0
  %985 = vmatpush1.msra.mxu0 0.0
  %986 = vmatprep.subr.mxu0 0.0
  %987 = vmatpush1.msra.mxu0 0.0
  %988 = vmatprep.subr.mxu0 0.0
  %989 = vmatpush1.msra.mxu0 0.0
  %990 = vmatprep.subr.mxu0 0.0
  %991 = vmatpush1.msra.mxu0 0.0
  %992 = vmatprep.subr.mxu0 0.0
  %993 = vmatpush1.msra.mxu0 0.0
  %994 = vmatprep.subr.mxu0 0.0
  %995 = vmatpush1.msra.mxu0 0.0
  %996 = vmatprep.subr.mxu0 0.0
  %997 = vmatpush1.msra.mxu0 0.0
  %998 = vmatprep.subr.mxu0 0.0
  %999 = vmatpush1.msra.mxu0 0.0
  %1000 = vmatprep.subr.mxu0 0.0
  %1001 = vmatpush1.msra.mxu0 0.0
  %1002 = vmatprep.subr.mxu0 0.0
  %1003 = vmatpush1.msra.mxu0 0.0
  %1004 = vmatprep.subr.mxu0 0.0
  %1005 = vmatpush1.msra.mxu0 0.0
  %1006 = vmatprep.subr.mxu0 0.0
  %1007 = vmatpush1.msra.mxu0 0.0
  %1008 = vmatprep.subr.mxu0 0.0
  %1009 = vmatpush1.msra.mxu0 0.0
  %1010 = vmatprep.subr.mxu0 0.0
  %1011 = vmatpush1.msra.mxu0 0.0
  %1012 = vmatprep.subr.mxu0 0.0
  %1013 = vmatpush1.msra.mxu0 0.0
  %1014 = vmatprep.subr.mxu0 0.0
  %1015 = vmatpush1.msra.mxu0 0.0
  %1016 = vmatprep.subr.mxu0 0.0
  %1017 = vmatpush1.msra.mxu0 0.0
  %1018 = vmatprep.subr.mxu0 0.0
  %1019 = vmatpush1.msra.mxu0 0.0
  %1020 = vmatprep.subr.mxu0 0.0
  %1021 = vmatpush1.msra.mxu0 0.0
  %1022 = vmatprep.mubr.f32.mxu0 0.0
  %1023 = vmatmul.mubr.f32.gmra.mrb[0].mxu0 %v497
  %v1024 = vpop.f32.mrb[0].mxu0
  %v1025 = vadd.f32 0.0, %v1024
  %v1026 = vpop.f32.mrb[0].mxu0
  %1027 = vmatprep.mubr.f32.mxu0 0.0
  %1028 = vmatmul.mubr.f32.gmra.mrb[0].mxu0 %v500
  %v1029 = vpop.f32.mrb[0].mxu0
  %v1030 = vadd.f32 0.0, %v1029
  %v1031 = vpop.f32.mrb[0].mxu0
  %1032 = vmatprep.mubr.f32.mxu0 0.0
  %1033 = vmatmul.mubr.f32.gmra.mrb[0].mxu0 %v503
  %v1034 = vpop.f32.mrb[0].mxu0
  %v1035 = vadd.f32 0.0, %v1034
  %v1036 = vpop.f32.mrb[0].mxu0
  %1037 = vmatprep.mubr.f32.mxu0 0.0
  %1038 = vmatmul.mubr.f32.gmra.mrb[0].mxu0 %v506
  %v1039 = vpop.f32.mrb[0].mxu0
  %v1040 = vadd.f32 0.0, %v1039
  %v1041 = vpop.f32.mrb[0].mxu0
  %1042 = vdwg.mxu0
  %v1043 = vadd.f32 %v938, %v1025
  %v1044 = vadd.f32 %v939, %v1030
  %v1045 = vadd.f32 %v940, %v1035
  %v1046 = vadd.f32 %v941, %v1040
  %1047 = vrot.lane.b32.xlu0 %v843, 64
  %v1048 = vpop.permute.xlu0 %1047
  %1049 = vrot.lane.b32.xlu0 %v844, 64
  %v1050 = vpop.permute.xlu0 %1049
  %1051 = vrot.lane.b32.xlu0 %v845, 64
  %v1052 = vpop.permute.xlu0 %1051
  %1053 = vrot.lane.b32.xlu0 %v846, 64
  %v1054 = vpop.permute.xlu0 %1053
  %1059 = vmatprep.subr.mxu0 0.0
  %1060 = vmatpush1.msra.mxu0 %v1048
  %1061 = vmatprep.subr.mxu0 0.0
  %1062 = vmatpush1.msra.mxu0 %v1050
  %1063 = vmatprep.subr.mxu0 0.0
  %1064 = vmatpush1.msra.mxu0 %v1052
  %1065 = vmatprep.subr.mxu0 0.0
  %1066 = vmatpush1.msra.mxu0 %v1054
  %1067 = vmatprep.subr.mxu0 0.0
  %1068 = vmatpush1.msra.mxu0 0.0
  %1069 = vmatprep.subr.mxu0 0.0
  %1070 = vmatpush1.msra.mxu0 0.0
  %1071 = vmatprep.subr.mxu0 0.0
  %1072 = vmatpush1.msra.mxu0 0.0
  %1073 = vmatprep.subr.mxu0 0.0
  %1074 = vmatpush1.msra.mxu0 0.0
  %1075 = vmatprep.subr.mxu0 0.0
  %1076 = vmatpush1.msra.mxu0 0.0
  %1077 = vmatprep.subr.mxu0 0.0
  %1078 = vmatpush1.msra.mxu0 0.0
  %1079 = vmatprep.subr.mxu0 0.0
  %1080 = vmatpush1.msra.mxu0 0.0
  %1081 = vmatprep.subr.mxu0 0.0
  %1082 = vmatpush1.msra.mxu0 0.0
  %1083 = vmatprep.subr.mxu0 0.0
  %1084 = vmatpush1.msra.mxu0 0.0
  %1085 = vmatprep.subr.mxu0 0.0
  %1086 = vmatpush1.msra.mxu0 0.0
  %1087 = vmatprep.subr.mxu0 0.0
  %1088 = vmatpush1.msra.mxu0 0.0
  %1089 = vmatprep.subr.mxu0 0.0
  %1090 = vmatpush1.msra.mxu0 0.0
  %1091 = vmatprep.subr.mxu0 0.0
  %1092 = vmatpush1.msra.mxu0 0.0
  %1093 = vmatprep.subr.mxu0 0.0
  %1094 = vmatpush1.msra.mxu0 0.0
  %1095 = vmatprep.subr.mxu0 0.0
  %1096 = vmatpush1.msra.mxu0 0.0
  %1097 = vmatprep.subr.mxu0 0.0
  %1098 = vmatpush1.msra.mxu0 0.0
  %1099 = vmatprep.subr.mxu0 0.0
  %1100 = vmatpush1.msra.mxu0 0.0
  %1101 = vmatprep.subr.mxu0 0.0
  %1102 = vmatpush1.msra.mxu0 0.0
  %1103 = vmatprep.subr.mxu0 0.0
  %1104 = vmatpush1.msra.mxu0 0.0
  %1105 = vmatprep.subr.mxu0 0.0
  %1106 = vmatpush1.msra.mxu0 0.0
  %1107 = vmatprep.subr.mxu0 0.0
  %1108 = vmatpush1.msra.mxu0 0.0
  %1109 = vmatprep.subr.mxu0 0.0
  %1110 = vmatpush1.msra.mxu0 0.0
  %1111 = vmatprep.subr.mxu0 0.0
  %1112 = vmatpush1.msra.mxu0 0.0
  %1113 = vmatprep.subr.mxu0 0.0
  %1114 = vmatpush1.msra.mxu0 0.0
  %1115 = vmatprep.subr.mxu0 0.0
  %1116 = vmatpush1.msra.mxu0 0.0
  %1117 = vmatprep.subr.mxu0 0.0
  %1118 = vmatpush1.msra.mxu0 0.0
  %1119 = vmatprep.subr.mxu0 0.0
  %1120 = vmatpush1.msra.mxu0 0.0
  %1121 = vmatprep.subr.mxu0 0.0
  %1122 = vmatpush1.msra.mxu0 0.0
  %1123 = vmatprep.mubr.f32.mxu0 0.0
  %1124 = vmatmul.mubr.f32.gmra.mrb[0].mxu0 %v598
  %v1125 = vpop.f32.mrb[0].mxu0
  %v1126 = vadd.f32 0.0, %v1125
  %v1127 = vpop.f32.mrb[0].mxu0
  %1128 = vmatprep.mubr.f32.mxu0 0.0
  %1129 = vmatmul.mubr.f32.gmra.mrb[0].mxu0 %v601
  %v1130 = vpop.f32.mrb[0].mxu0
  %v1131 = vadd.f32 0.0, %v1130
  %v1132 = vpop.f32.mrb[0].mxu0
  %1133 = vmatprep.mubr.f32.mxu0 0.0
  %1134 = vmatmul.mubr.f32.gmra.mrb[0].mxu0 %v604
  %v1135 = vpop.f32.mrb[0].mxu0
  %v1136 = vadd.f32 0.0, %v1135
  %v1137 = vpop.f32.mrb[0].mxu0
  %1138 = vmatprep.mubr.f32.mxu0 0.0
  %1139 = vmatmul.mubr.f32.gmra.mrb[0].mxu0 %v607
  %v1140 = vpop.f32.mrb[0].mxu0
  %v1141 = vadd.f32 0.0, %v1140
  %v1142 = vpop.f32.mrb[0].mxu0
  %1143 = vdwg.mxu0
  %v1144 = vadd.f32 %v1043, %v1126
  %v1145 = vadd.f32 %v1044, %v1131
  %v1146 = vadd.f32 %v1045, %v1136
  %v1147 = vadd.f32 %v1046, %v1141
  %v1148 = vtanh.pop %v1144
  %v1149 = vtanh.pop %v1145
  %v1150 = vtanh.pop %v1146
  %v1151 = vtanh.pop %v1147
  %v1152 = vmul.f32 %v715, %v1148
  %v1153 = vmul.f32 %v717, %v1149
  %v1154 = vmul.f32 %v719, %v1150
  %v1155 = vmul.f32 %v721, %v1151
  %v1156 = vsub.f32 1.0, %v715
  %v1157 = vsub.f32 1.0, %v717
  %v1158 = vsub.f32 1.0, %v719
  %v1159 = vsub.f32 1.0, %v721
  %v1160 = vmul.f32 %v1156, %v47
  %v1161 = vmul.f32 %v1157, %v48
  %v1162 = vmul.f32 %v1158, %v49
  %v1163 = vmul.f32 %v1159, %v50
  %v1164 = vadd.f32 %v1152, %v1160
  %v1165 = vadd.f32 %v1153, %v1161
  %v1166 = vadd.f32 %v1154, %v1162
  %v1167 = vadd.f32 %v1155, %v1163
  %1168 = vst.msk [vmem:[%s8] sm:$0xff] %vm77, %v1164
  %1169 = vst.msk [vmem:[%s8 + $0x8] sm:$0xff] %vm77, %v1165
  %1170 = vst.msk [vmem:[%s8 + $0x10] sm:$0xff] %vm77, %v1166
  %1171 = vst.msk [vmem:[%s8 + $0x18] sm:$0xff] %vm77, %v1167
  %s1172 = scalar_lea.vmem %s1, 32
  %v1173 = vld [vmem:[%s1172] sm:$0xff]
  %v1174 = vld [vmem:[%s1172 + $0x8] sm:$0xff]
  %v1175 = vld [vmem:[%s1172 + $0x10] sm:$0xff]
  %v1176 = vld [vmem:[%s1172 + $0x18] sm:$0xff]
  %s1177 = scalar_lea.vmem %s3, 96
  %v1178 = vld [vmem:[%s1177] sm:$0xff]
  %v1179 = vld [vmem:[%s1177 + $0x8] sm:$0xff]
  %v1180 = vld [vmem:[%s1177 + $0x10] sm:$0xff]
  %v1181 = vld [vmem:[%s1177 + $0x18] sm:$0xff]
  %v1182 = vld [vmem:[%s1177 + $0x20] sm:$0xff]
  %v1183 = vld [vmem:[%s1177 + $0x28] sm:$0xff]
  %v1184 = vld [vmem:[%s1177 + $0x30] sm:$0xff]
  %v1185 = vld [vmem:[%s1177 + $0x38] sm:$0xff]
  %v1186 = vld [vmem:[%s1177 + $0x40] sm:$0xff]
  %v1187 = vld [vmem:[%s1177 + $0x48] sm:$0xff]
  %v1188 = vld [vmem:[%s1177 + $0x50] sm:$0xff]
  %v1189 = vld [vmem:[%s1177 + $0x58] sm:$0xff]
  %s1190 = scalar_lea.vmem %s4, 64
  %v1191 = vld [vmem:[%s1190] sm:$0xff]
  %v1192 = vld [vmem:[%s1190 + $0x8] sm:$0xff]
  %v1193 = vld [vmem:[%s1190 + $0x10] sm:$0xff]
  %v1194 = vld [vmem:[%s1190 + $0x18] sm:$0xff]
  %v1195 = vld [vmem:[%s1190 + $0x20] sm:$0xff]
  %v1196 = vld [vmem:[%s1190 + $0x28] sm:$0xff]
  %v1197 = vld [vmem:[%s1190 + $0x30] sm:$0xff]
  %v1198 = vld [vmem:[%s1190 + $0x38] sm:$0xff]
  %s1199 = scalar_lea.vmem %s5, 32
  %v1200 = vld [vmem:[%s1199] sm:$0xff]
  %v1201 = vld [vmem:[%s1199 + $0x8] sm:$0xff]
  %v1202 = vld [vmem:[%s1199 + $0x10] sm:$0xff]
  %v1203 = vld [vmem:[%s1199 + $0x18] sm:$0xff]
  %s1204 = scalar_lea.vmem %s6, 1
  %v1205 = vld [vmem:[%s1204] sm:$0x1]
  %s1206 = scalar_lea.vmem %s7, 1
  %v1207 = vld [vmem:[%s1206] sm:$0x1]
  %v1209 = vsel %vm77, %v1164, 0
  %v1212 = vsel %vm77, %v1165, 0
  %v1215 = vsel %vm77, %v1166, 0
  %v1218 = vsel %vm77, %v1167, 0
  %1220 = vmatprep.subr.mxu0 %v1179
  %1221 = vmatpush1.msra.mxu0 %v1178
  %1222 = vmatprep.subr.mxu0 %v1182
  %1223 = vmatpush1.msra.mxu0 %v1181
  %1224 = vmatprep.subr.mxu0 %v1185
  %1225 = vmatpush1.msra.mxu0 %v1184
  %1226 = vmatprep.subr.mxu0 %v1188
  %1227 = vmatpush1.msra.mxu0 %v1187
  %1228 = vmatprep.subr.mxu0 0.0
  %1229 = vmatpush1.msra.mxu0 0.0
  %1230 = vmatprep.subr.mxu0 0.0
  %1231 = vmatpush1.msra.mxu0 0.0
  %1232 = vmatprep.subr.mxu0 0.0
  %1233 = vmatpush1.msra.mxu0 0.0
  %1234 = vmatprep.subr.mxu0 0.0
  %1235 = vmatpush1.msra.mxu0 0.0
  %1236 = vmatprep.subr.mxu0 0.0
  %1237 = vmatpush1.msra.mxu0 0.0
  %1238 = vmatprep.subr.mxu0 0.0
  %1239 = vmatpush1.msra.mxu0 0.0
  %1240 = vmatprep.subr.mxu0 0.0
  %1241 = vmatpush1.msra.mxu0 0.0
  %1242 = vmatprep.subr.mxu0 0.0
  %1243 = vmatpush1.msra.mxu0 0.0
  %1244 = vmatprep.subr.mxu0 0.0
  %1245 = vmatpush1.msra.mxu0 0.0
  %1246 = vmatprep.subr.mxu0 0.0
  %1247 = vmatpush1.msra.mxu0 0.0
  %1248 = vmatprep.subr.mxu0 0.0
  %1249 = vmatpush1.msra.mxu0 0.0
  %1250 = vmatprep.subr.mxu0 0.0
  %1251 = vmatpush1.msra.mxu0 0.0
  %1252 = vmatprep.subr.mxu0 0.0
  %1253 = vmatpush1.msra.mxu0 0.0
  %1254 = vmatprep.subr.mxu0 0.0
  %1255 = vmatpush1.msra.mxu0 0.0
  %1256 = vmatprep.subr.mxu0 0.0
  %1257 = vmatpush1.msra.mxu0 0.0
  %1258 = vmatprep.subr.mxu0 0.0
  %1259 = vmatpush1.msra.mxu0 0.0
  %1260 = vmatprep.subr.mxu0 0.0
  %1261 = vmatpush1.msra.mxu0 0.0
  %1262 = vmatprep.subr.mxu0 0.0
  %1263 = vmatpush1.msra.mxu0 0.0
  %1264 = vmatprep.subr.mxu0 0.0
  %1265 = vmatpush1.msra.mxu0 0.0
  %1266 = vmatprep.subr.mxu0 0.0
  %1267 = vmatpush1.msra.mxu0 0.0
  %1268 = vmatprep.subr.mxu0 0.0
  %1269 = vmatpush1.msra.mxu0 0.0
  %1270 = vmatprep.subr.mxu0 0.0
  %1271 = vmatpush1.msra.mxu0 0.0
  %1272 = vmatprep.subr.mxu0 0.0
  %1273 = vmatpush1.msra.mxu0 0.0
  %1274 = vmatprep.subr.mxu0 0.0
  %1275 = vmatpush1.msra.mxu0 0.0
  %1276 = vmatprep.subr.mxu0 0.0
  %1277 = vmatpush1.msra.mxu0 0.0
  %1278 = vmatprep.subr.mxu0 0.0
  %1279 = vmatpush1.msra.mxu0 0.0
  %1280 = vmatprep.subr.mxu0 0.0
  %1281 = vmatpush1.msra.mxu0 0.0
  %1282 = vmatprep.subr.mxu0 0.0
  %1283 = vmatpush1.msra.mxu0 0.0
  %1284 = vmatprep.mubr.f32.mxu0 0.0
  %1285 = vmatmul.mubr.f32.gmra.mrb[0].mxu0 %v1209
  %v1286 = vpop.f32.mrb[0].mxu0
  %v1287 = vadd.f32 0.0, %v1286
  %v1288 = vpop.f32.mrb[0].mxu0
  %v1289 = vadd.f32 0.0, %v1288
  %1290 = vmatprep.mubr.f32.mxu0 0.0
  %1291 = vmatmul.mubr.f32.gmra.mrb[0].mxu0 %v1212
  %v1292 = vpop.f32.mrb[0].mxu0
  %v1293 = vadd.f32 0.0, %v1292
  %v1294 = vpop.f32.mrb[0].mxu0
  %v1295 = vadd.f32 0.0, %v1294
  %1296 = vmatprep.mubr.f32.mxu0 0.0
  %1297 = vmatmul.mubr.f32.gmra.mrb[0].mxu0 %v1215
  %v1298 = vpop.f32.mrb[0].mxu0
  %v1299 = vadd.f32 0.0, %v1298
  %v1300 = vpop.f32.mrb[0].mxu0
  %v1301 = vadd.f32 0.0, %v1300
  %1302 = vmatprep.mubr.f32.mxu0 0.0
  %1303 = vmatmul.mubr.f32.gmra.mrb[0].mxu0 %v1218
  %v1304 = vpop.f32.mrb[0].mxu0
  %v1305 = vadd.f32 0.0, %v1304
  %v1306 = vpop.f32.mrb[0].mxu0
  %v1307 = vadd.f32 0.0, %v1306
  %1308 = vdwg.mxu0
  %1309 = vmatprep.subr.mxu0 0.0
  %1310 = vmatpush1.msra.mxu0 %v1180
  %1311 = vmatprep.subr.mxu0 0.0
  %1312 = vmatpush1.msra.mxu0 %v1183
  %1313 = vmatprep.subr.mxu0 0.0
  %1314 = vmatpush1.msra.mxu0 %v1186
  %1315 = vmatprep.subr.mxu0 0.0
  %1316 = vmatpush1.msra.mxu0 %v1189
  %1317 = vmatprep.subr.mxu0 0.0
  %1318 = vmatpush1.msra.mxu0 0.0
  %1319 = vmatprep.subr.mxu0 0.0
  %1320 = vmatpush1.msra.mxu0 0.0
  %1321 = vmatprep.subr.mxu0 0.0
  %1322 = vmatpush1.msra.mxu0 0.0
  %1323 = vmatprep.subr.mxu0 0.0
  %1324 = vmatpush1.msra.mxu0 0.0
  %1325 = vmatprep.subr.mxu0 0.0
  %1326 = vmatpush1.msra.mxu0 0.0
  %1327 = vmatprep.subr.mxu0 0.0
  %1328 = vmatpush1.msra.mxu0 0.0
  %1329 = vmatprep.subr.mxu0 0.0
  %1330 = vmatpush1.msra.mxu0 0.0
  %1331 = vmatprep.subr.mxu0 0.0
  %1332 = vmatpush1.msra.mxu0 0.0
  %1333 = vmatprep.subr.mxu0 0.0
  %1334 = vmatpush1.msra.mxu0 0.0
  %1335 = vmatprep.subr.mxu0 0.0
  %1336 = vmatpush1.msra.mxu0 0.0
  %1337 = vmatprep.subr.mxu0 0.0
  %1338 = vmatpush1.msra.mxu0 0.0
  %1339 = vmatprep.subr.mxu0 0.0
  %1340 = vmatpush1.msra.mxu0 0.0
  %1341 = vmatprep.subr.mxu0 0.0
  %1342 = vmatpush1.msra.mxu0 0.0
  %1343 = vmatprep.subr.mxu0 0.0
  %1344 = vmatpush1.msra.mxu0 0.0
  %1345 = vmatprep.subr.mxu0 0.0
  %1346 = vmatpush1.msra.mxu0 0.0
  %1347 = vmatprep.subr.mxu0 0.0
  %1348 = vmatpush1.msra.mxu0 0.0
  %1349 = vmatprep.subr.mxu0 0.0
  %1350 = vmatpush1.msra.mxu0 0.0
  %1351 = vmatprep.subr.mxu0 0.0
  %1352 = vmatpush1.msra.mxu0 0.0
  %1353 = vmatprep.subr.mxu0 0.0
  %1354 = vmatpush1.msra.mxu0 0.0
  %1355 = vmatprep.subr.mxu0 0.0
  %1356 = vmatpush1.msra.mxu0 0.0
  %1357 = vmatprep.subr.mxu0 0.0
  %1358 = vmatpush1.msra.mxu0 0.0
  %1359 = vmatprep.subr.mxu0 0.0
  %1360 = vmatpush1.msra.mxu0 0.0
  %1361 = vmatprep.subr.mxu0 0.0
  %1362 = vmatpush1.msra.mxu0 0.0
  %1363 = vmatprep.subr.mxu0 0.0
  %1364 = vmatpush1.msra.mxu0 0.0
  %1365 = vmatprep.subr.mxu0 0.0
  %1366 = vmatpush1.msra.mxu0 0.0
  %1367 = vmatprep.subr.mxu0 0.0
  %1368 = vmatpush1.msra.mxu0 0.0
  %1369 = vmatprep.subr.mxu0 0.0
  %1370 = vmatpush1.msra.mxu0 0.0
  %1371 = vmatprep.subr.mxu0 0.0
  %1372 = vmatpush1.msra.mxu0 0.0
  %1373 = vmatprep.mubr.f32.mxu0 0.0
  %1374 = vmatmul.mubr.f32.gmra.mrb[0].mxu0 %v1209
  %v1375 = vpop.f32.mrb[0].mxu0
  %v1376 = vadd.f32 0.0, %v1375
  %v1377 = vpop.f32.mrb[0].mxu0
  %1378 = vmatprep.mubr.f32.mxu0 0.0
  %1379 = vmatmul.mubr.f32.gmra.mrb[0].mxu0 %v1212
  %v1380 = vpop.f32.mrb[0].mxu0
  %v1381 = vadd.f32 0.0, %v1380
  %v1382 = vpop.f32.mrb[0].mxu0
  %1383 = vmatprep.mubr.f32.mxu0 0.0
  %1384 = vmatmul.mubr.f32.gmra.mrb[0].mxu0 %v1215
  %v1385 = vpop.f32.mrb[0].mxu0
  %v1386 = vadd.f32 0.0, %v1385
  %v1387 = vpop.f32.mrb[0].mxu0
  %1388 = vmatprep.mubr.f32.mxu0 0.0
  %1389 = vmatmul.mubr.f32.gmra.mrb[0].mxu0 %v1218
  %v1390 = vpop.f32.mrb[0].mxu0
  %v1391 = vadd.f32 0.0, %v1390
  %v1392 = vpop.f32.mrb[0].mxu0
  %1393 = vdwg.mxu0
  %v1395 = vsel %vm77, %v1173, 0
  %v1398 = vsel %vm77, %v1174, 0
  %v1401 = vsel %vm77, %v1175, 0
  %v1404 = vsel %vm77, %v1176, 0
  %1406 = vmatprep.subr.mxu0 %v1192
  %1407 = vmatpush1.msra.mxu0 %v1191
  %1408 = vmatprep.subr.mxu0 %v1194
  %1409 = vmatpush1.msra.mxu0 %v1193
  %1410 = vmatprep.subr.mxu0 %v1196
  %1411 = vmatpush1.msra.mxu0 %v1195
  %1412 = vmatprep.subr.mxu0 %v1198
  %1413 = vmatpush1.msra.mxu0 %v1197
  %1414 = vmatprep.subr.mxu0 0.0
  %1415 = vmatpush1.msra.mxu0 0.0
  %1416 = vmatprep.subr.mxu0 0.0
  %1417 = vmatpush1.msra.mxu0 0.0
  %1418 = vmatprep.subr.mxu0 0.0
  %1419 = vmatpush1.msra.mxu0 0.0
  %1420 = vmatprep.subr.mxu0 0.0
  %1421 = vmatpush1.msra.mxu0 0.0
  %1422 = vmatprep.subr.mxu0 0.0
  %1423 = vmatpush1.msra.mxu0 0.0
  %1424 = vmatprep.subr.mxu0 0.0
  %1425 = vmatpush1.msra.mxu0 0.0
  %1426 = vmatprep.subr.mxu0 0.0
  %1427 = vmatpush1.msra.mxu0 0.0
  %1428 = vmatprep.subr.mxu0 0.0
  %1429 = vmatpush1.msra.mxu0 0.0
  %1430 = vmatprep.subr.mxu0 0.0
  %1431 = vmatpush1.msra.mxu0 0.0
  %1432 = vmatprep.subr.mxu0 0.0
  %1433 = vmatpush1.msra.mxu0 0.0
  %1434 = vmatprep.subr.mxu0 0.0
  %1435 = vmatpush1.msra.mxu0 0.0
  %1436 = vmatprep.subr.mxu0 0.0
  %1437 = vmatpush1.msra.mxu0 0.0
  %1438 = vmatprep.subr.mxu0 0.0
  %1439 = vmatpush1.msra.mxu0 0.0
  %1440 = vmatprep.subr.mxu0 0.0
  %1441 = vmatpush1.msra.mxu0 0.0
  %1442 = vmatprep.subr.mxu0 0.0
  %1443 = vmatpush1.msra.mxu0 0.0
  %1444 = vmatprep.subr.mxu0 0.0
  %1445 = vmatpush1.msra.mxu0 0.0
  %1446 = vmatprep.subr.mxu0 0.0
  %1447 = vmatpush1.msra.mxu0 0.0
  %1448 = vmatprep.subr.mxu0 0.0
  %1449 = vmatpush1.msra.mxu0 0.0
  %1450 = vmatprep.subr.mxu0 0.0
  %1451 = vmatpush1.msra.mxu0 0.0
  %1452 = vmatprep.subr.mxu0 0.0
  %1453 = vmatpush1.msra.mxu0 0.0
  %1454 = vmatprep.subr.mxu0 0.0
  %1455 = vmatpush1.msra.mxu0 0.0
  %1456 = vmatprep.subr.mxu0 0.0
  %1457 = vmatpush1.msra.mxu0 0.0
  %1458 = vmatprep.subr.mxu0 0.0
  %1459 = vmatpush1.msra.mxu0 0.0
  %1460 = vmatprep.subr.mxu0 0.0
  %1461 = vmatpush1.msra.mxu0 0.0
  %1462 = vmatprep.subr.mxu0 0.0
  %1463 = vmatpush1.msra.mxu0 0.0
  %1464 = vmatprep.subr.mxu0 0.0
  %1465 = vmatpush1.msra.mxu0 0.0
  %1466 = vmatprep.subr.mxu0 0.0
  %1467 = vmatpush1.msra.mxu0 0.0
  %1468 = vmatprep.subr.mxu0 0.0
  %1469 = vmatpush1.msra.mxu0 0.0
  %1470 = vmatprep.mubr.f32.mxu0 0.0
  %1471 = vmatmul.mubr.f32.gmra.mrb[0].mxu0 %v1395
  %v1472 = vpop.f32.mrb[0].mxu0
  %v1473 = vadd.f32 0.0, %v1472
  %v1474 = vpop.f32.mrb[0].mxu0
  %v1475 = vadd.f32 0.0, %v1474
  %1476 = vmatprep.mubr.f32.mxu0 0.0
  %1477 = vmatmul.mubr.f32.gmra.mrb[0].mxu0 %v1398
  %v1478 = vpop.f32.mrb[0].mxu0
  %v1479 = vadd.f32 0.0, %v1478
  %v1480 = vpop.f32.mrb[0].mxu0
  %v1481 = vadd.f32 0.0, %v1480
  %1482 = vmatprep.mubr.f32.mxu0 0.0
  %1483 = vmatmul.mubr.f32.gmra.mrb[0].mxu0 %v1401
  %v1484 = vpop.f32.mrb[0].mxu0
  %v1485 = vadd.f32 0.0, %v1484
  %v1486 = vpop.f32.mrb[0].mxu0
  %v1487 = vadd.f32 0.0, %v1486
  %1488 = vmatprep.mubr.f32.mxu0 0.0
  %1489 = vmatmul.mubr.f32.gmra.mrb[0].mxu0 %v1404
  %v1490 = vpop.f32.mrb[0].mxu0
  %v1491 = vadd.f32 0.0, %v1490
  %v1492 = vpop.f32.mrb[0].mxu0
  %v1493 = vadd.f32 0.0, %v1492
  %1494 = vdwg.mxu0
  %v1495 = vadd.f32 %v1287, %v1473
  %v1496 = vadd.f32 %v1289, %v1475
  %v1497 = vadd.f32 %v1293, %v1479
  %v1498 = vadd.f32 %v1295, %v1481
  %v1499 = vadd.f32 %v1299, %v1485
  %v1500 = vadd.f32 %v1301, %v1487
  %v1501 = vadd.f32 %v1305, %v1491
  %v1502 = vadd.f32 %v1307, %v1493
  %1503 = vmatprep.subr.mxu0 0.0
  %1504 = vmatpush1.msra.mxu0 %v1495
  %1505 = vmatprep.subr.mxu0 0.0
  %1506 = vmatpush1.msra.mxu0 %v1497
  %1507 = vmatprep.subr.mxu0 0.0
  %1508 = vmatpush1.msra.mxu0 %v1499
  %1509 = vmatprep.subr.mxu0 0.0
  %1510 = vmatpush1.msra.mxu0 %v1501
  %1511 = vmatprep.subr.mxu0 0.0
  %1512 = vmatpush1.msra.mxu0 0.0
  %1513 = vmatprep.subr.mxu0 0.0
  %1514 = vmatpush1.msra.mxu0 0.0
  %1515 = vmatprep.subr.mxu0 0.0
  %1516 = vmatpush1.msra.mxu0 0.0
  %1517 = vmatprep.subr.mxu0 0.0
  %1518 = vmatpush1.msra.mxu0 0.0
  %1519 = vmatprep.subr.mxu0 0.0
  %1520 = vmatpush1.msra.mxu0 0.0
  %1521 = vmatprep.subr.mxu0 0.0
  %1522 = vmatpush1.msra.mxu0 0.0
  %1523 = vmatprep.subr.mxu0 0.0
  %1524 = vmatpush1.msra.mxu0 0.0
  %1525 = vmatprep.subr.mxu0 0.0
  %1526 = vmatpush1.msra.mxu0 0.0
  %1527 = vmatprep.subr.mxu0 0.0
  %1528 = vmatpush1.msra.mxu0 0.0
  %1529 = vmatprep.subr.mxu0 0.0
  %1530 = vmatpush1.msra.mxu0 0.0
  %1531 = vmatprep.subr.mxu0 0.0
  %1532 = vmatpush1.msra.mxu0 0.0
  %1533 = vmatprep.subr.mxu0 0.0
  %1534 = vmatpush1.msra.mxu0 0.0
  %1535 = vmatprep.subr.mxu0 0.0
  %1536 = vmatpush1.msra.mxu0 0.0
  %1537 = vmatprep.subr.mxu0 0.0
  %1538 = vmatpush1.msra.mxu0 0.0
  %1539 = vmatprep.subr.mxu0 0.0
  %1540 = vmatpush1.msra.mxu0 0.0
  %1541 = vmatprep.subr.mxu0 0.0
  %1542 = vmatpush1.msra.mxu0 0.0
  %1543 = vmatprep.subr.mxu0 0.0
  %1544 = vmatpush1.msra.mxu0 0.0
  %1545 = vmatprep.subr.mxu0 0.0
  %1546 = vmatpush1.msra.mxu0 0.0
  %1547 = vmatprep.subr.mxu0 0.0
  %1548 = vmatpush1.msra.mxu0 0.0
  %1549 = vmatprep.subr.mxu0 0.0
  %1550 = vmatpush1.msra.mxu0 0.0
  %1551 = vmatprep.subr.mxu0 0.0
  %1552 = vmatpush1.msra.mxu0 0.0
  %1553 = vmatprep.subr.mxu0 0.0
  %1554 = vmatpush1.msra.mxu0 0.0
  %1555 = vmatprep.subr.mxu0 0.0
  %1556 = vmatpush1.msra.mxu0 0.0
  %1557 = vmatprep.subr.mxu0 0.0
  %1558 = vmatpush1.msra.mxu0 0.0
  %1559 = vmatprep.subr.mxu0 0.0
  %1560 = vmatpush1.msra.mxu0 0.0
  %1561 = vmatprep.subr.mxu0 0.0
  %1562 = vmatpush1.msra.mxu0 0.0
  %1563 = vmatprep.subr.mxu0 0.0
  %1564 = vmatpush1.msra.mxu0 0.0
  %1565 = vmatprep.subr.mxu0 0.0
  %1566 = vmatpush1.msra.mxu0 0.0
  %1567 = vmatprep.mubr.f32.mxu0 0.0
  %1568 = vmatmul.mubr.f32.gmra.mrb[0].mxu0 %v374
  %v1569 = vpop.f32.mrb[0].mxu0
  %v1570 = vadd.f32 0.0, %v1569
  %v1571 = vpop.f32.mrb[0].mxu0
  %1572 = vmatprep.mubr.f32.mxu0 0.0
  %1573 = vmatmul.mubr.f32.gmra.mrb[0].mxu0 %v377
  %v1574 = vpop.f32.mrb[0].mxu0
  %v1575 = vadd.f32 0.0, %v1574
  %v1576 = vpop.f32.mrb[0].mxu0
  %1577 = vmatprep.mubr.f32.mxu0 0.0
  %1578 = vmatmul.mubr.f32.gmra.mrb[0].mxu0 %v380
  %v1579 = vpop.f32.mrb[0].mxu0
  %v1580 = vadd.f32 0.0, %v1579
  %v1581 = vpop.f32.mrb[0].mxu0
  %1582 = vmatprep.mubr.f32.mxu0 0.0
  %1583 = vmatmul.mubr.f32.gmra.mrb[0].mxu0 %v383
  %v1584 = vpop.f32.mrb[0].mxu0
  %v1585 = vadd.f32 0.0, %v1584
  %v1586 = vpop.f32.mrb[0].mxu0
  %1587 = vdwg.mxu0
  %v1589 = vlaneseq
  %v1590 = vshrl.u32 %v1589, 7
  %v1591 = vsub.s32 0, %v1590
  %v1592 = vrot.slane %v1205, %v1591
  %v1594 = vadd.f32 %v1592, %v1570
  %v1595 = vadd.f32 %v1592, %v1575
  %v1596 = vadd.f32 %v1592, %v1580
  %v1597 = vadd.f32 %v1592, %v1585
  %1602 = vrot.lane.b32.xlu0 %v1495, 64
  %v1603 = vpop.permute.xlu0 %1602
  %1604 = vrot.lane.b32.xlu0 %v1497, 64
  %v1605 = vpop.permute.xlu0 %1604
  %1606 = vrot.lane.b32.xlu0 %v1499, 64
  %v1607 = vpop.permute.xlu0 %1606
  %1608 = vrot.lane.b32.xlu0 %v1501, 64
  %v1609 = vpop.permute.xlu0 %1608
  %1614 = vmatprep.subr.mxu0 0.0
  %1615 = vmatpush1.msra.mxu0 %v1603
  %1616 = vmatprep.subr.mxu0 0.0
  %1617 = vmatpush1.msra.mxu0 %v1605
  %1618 = vmatprep.subr.mxu0 0.0
  %1619 = vmatpush1.msra.mxu0 %v1607
  %1620 = vmatprep.subr.mxu0 0.0
  %1621 = vmatpush1.msra.mxu0 %v1609
  %1622 = vmatprep.subr.mxu0 0.0
  %1623 = vmatpush1.msra.mxu0 0.0
  %1624 = vmatprep.subr.mxu0 0.0
  %1625 = vmatpush1.msra.mxu0 0.0
  %1626 = vmatprep.subr.mxu0 0.0
  %1627 = vmatpush1.msra.mxu0 0.0
  %1628 = vmatprep.subr.mxu0 0.0
  %1629 = vmatpush1.msra.mxu0 0.0
  %1630 = vmatprep.subr.mxu0 0.0
  %1631 = vmatpush1.msra.mxu0 0.0
  %1632 = vmatprep.subr.mxu0 0.0
  %1633 = vmatpush1.msra.mxu0 0.0
  %1634 = vmatprep.subr.mxu0 0.0
  %1635 = vmatpush1.msra.mxu0 0.0
  %1636 = vmatprep.subr.mxu0 0.0
  %1637 = vmatpush1.msra.mxu0 0.0
  %1638 = vmatprep.subr.mxu0 0.0
  %1639 = vmatpush1.msra.mxu0 0.0
  %1640 = vmatprep.subr.mxu0 0.0
  %1641 = vmatpush1.msra.mxu0 0.0
  %1642 = vmatprep.subr.mxu0 0.0
  %1643 = vmatpush1.msra.mxu0 0.0
  %1644 = vmatprep.subr.mxu0 0.0
  %1645 = vmatpush1.msra.mxu0 0.0
  %1646 = vmatprep.subr.mxu0 0.0
  %1647 = vmatpush1.msra.mxu0 0.0
  %1648 = vmatprep.subr.mxu0 0.0
  %1649 = vmatpush1.msra.mxu0 0.0
  %1650 = vmatprep.subr.mxu0 0.0
  %1651 = vmatpush1.msra.mxu0 0.0
  %1652 = vmatprep.subr.mxu0 0.0
  %1653 = vmatpush1.msra.mxu0 0.0
  %1654 = vmatprep.subr.mxu0 0.0
  %1655 = vmatpush1.msra.mxu0 0.0
  %1656 = vmatprep.subr.mxu0 0.0
  %1657 = vmatpush1.msra.mxu0 0.0
  %1658 = vmatprep.subr.mxu0 0.0
  %1659 = vmatpush1.msra.mxu0 0.0
  %1660 = vmatprep.subr.mxu0 0.0
  %1661 = vmatpush1.msra.mxu0 0.0
  %1662 = vmatprep.subr.mxu0 0.0
  %1663 = vmatpush1.msra.mxu0 0.0
  %1664 = vmatprep.subr.mxu0 0.0
  %1665 = vmatpush1.msra.mxu0 0.0
  %1666 = vmatprep.subr.mxu0 0.0
  %1667 = vmatpush1.msra.mxu0 0.0
  %1668 = vmatprep.subr.mxu0 0.0
  %1669 = vmatpush1.msra.mxu0 0.0
  %1670 = vmatprep.subr.mxu0 0.0
  %1671 = vmatpush1.msra.mxu0 0.0
  %1672 = vmatprep.subr.mxu0 0.0
  %1673 = vmatpush1.msra.mxu0 0.0
  %1674 = vmatprep.subr.mxu0 0.0
  %1675 = vmatpush1.msra.mxu0 0.0
  %1676 = vmatprep.subr.mxu0 0.0
  %1677 = vmatpush1.msra.mxu0 0.0
  %1678 = vmatprep.mubr.f32.mxu0 0.0
  %1679 = vmatmul.mubr.f32.gmra.mrb[0].mxu0 %v497
  %v1680 = vpop.f32.mrb[0].mxu0
  %v1681 = vadd.f32 0.0, %v1680
  %v1682 = vpop.f32.mrb[0].mxu0
  %1683 = vmatprep.mubr.f32.mxu0 0.0
  %1684 = vmatmul.mubr.f32.gmra.mrb[0].mxu0 %v500
  %v1685 = vpop.f32.mrb[0].mxu0
  %v1686 = vadd.f32 0.0, %v1685
  %v1687 = vpop.f32.mrb[0].mxu0
  %1688 = vmatprep.mubr.f32.mxu0 0.0
  %1689 = vmatmul.mubr.f32.gmra.mrb[0].mxu0 %v503
  %v1690 = vpop.f32.mrb[0].mxu0
  %v1691 = vadd.f32 0.0, %v1690
  %v1692 = vpop.f32.mrb[0].mxu0
  %1693 = vmatprep.mubr.f32.mxu0 0.0
  %1694 = vmatmul.mubr.f32.gmra.mrb[0].mxu0 %v506
  %v1695 = vpop.f32.mrb[0].mxu0
  %v1696 = vadd.f32 0.0, %v1695
  %v1697 = vpop.f32.mrb[0].mxu0
  %1698 = vdwg.mxu0
  %v1699 = vadd.f32 %v1594, %v1681
  %v1700 = vadd.f32 %v1595, %v1686
  %v1701 = vadd.f32 %v1596, %v1691
  %v1702 = vadd.f32 %v1597, %v1696
  %1703 = vmatprep.subr.mxu0 0.0
  %1704 = vmatpush1.msra.mxu0 %v1496
  %1705 = vmatprep.subr.mxu0 0.0
  %1706 = vmatpush1.msra.mxu0 %v1498
  %1707 = vmatprep.subr.mxu0 0.0
  %1708 = vmatpush1.msra.mxu0 %v1500
  %1709 = vmatprep.subr.mxu0 0.0
  %1710 = vmatpush1.msra.mxu0 %v1502
  %1711 = vmatprep.subr.mxu0 0.0
  %1712 = vmatpush1.msra.mxu0 0.0
  %1713 = vmatprep.subr.mxu0 0.0
  %1714 = vmatpush1.msra.mxu0 0.0
  %1715 = vmatprep.subr.mxu0 0.0
  %1716 = vmatpush1.msra.mxu0 0.0
  %1717 = vmatprep.subr.mxu0 0.0
  %1718 = vmatpush1.msra.mxu0 0.0
  %1719 = vmatprep.subr.mxu0 0.0
  %1720 = vmatpush1.msra.mxu0 0.0
  %1721 = vmatprep.subr.mxu0 0.0
  %1722 = vmatpush1.msra.mxu0 0.0
  %1723 = vmatprep.subr.mxu0 0.0
  %1724 = vmatpush1.msra.mxu0 0.0
  %1725 = vmatprep.subr.mxu0 0.0
  %1726 = vmatpush1.msra.mxu0 0.0
  %1727 = vmatprep.subr.mxu0 0.0
  %1728 = vmatpush1.msra.mxu0 0.0
  %1729 = vmatprep.subr.mxu0 0.0
  %1730 = vmatpush1.msra.mxu0 0.0
  %1731 = vmatprep.subr.mxu0 0.0
  %1732 = vmatpush1.msra.mxu0 0.0
  %1733 = vmatprep.subr.mxu0 0.0
  %1734 = vmatpush1.msra.mxu0 0.0
  %1735 = vmatprep.subr.mxu0 0.0
  %1736 = vmatpush1.msra.mxu0 0.0
  %1737 = vmatprep.subr.mxu0 0.0
  %1738 = vmatpush1.msra.mxu0 0.0
  %1739 = vmatprep.subr.mxu0 0.0
  %1740 = vmatpush1.msra.mxu0 0.0
  %1741 = vmatprep.subr.mxu0 0.0
  %1742 = vmatpush1.msra.mxu0 0.0
  %1743 = vmatprep.subr.mxu0 0.0
  %1744 = vmatpush1.msra.mxu0 0.0
  %1745 = vmatprep.subr.mxu0 0.0
  %1746 = vmatpush1.msra.mxu0 0.0
  %1747 = vmatprep.subr.mxu0 0.0
  %1748 = vmatpush1.msra.mxu0 0.0
  %1749 = vmatprep.subr.mxu0 0.0
  %1750 = vmatpush1.msra.mxu0 0.0
  %1751 = vmatprep.subr.mxu0 0.0
  %1752 = vmatpush1.msra.mxu0 0.0
  %1753 = vmatprep.subr.mxu0 0.0
  %1754 = vmatpush1.msra.mxu0 0.0
  %1755 = vmatprep.subr.mxu0 0.0
  %1756 = vmatpush1.msra.mxu0 0.0
  %1757 = vmatprep.subr.mxu0 0.0
  %1758 = vmatpush1.msra.mxu0 0.0
  %1759 = vmatprep.subr.mxu0 0.0
  %1760 = vmatpush1.msra.mxu0 0.0
  %1761 = vmatprep.subr.mxu0 0.0
  %1762 = vmatpush1.msra.mxu0 0.0
  %1763 = vmatprep.subr.mxu0 0.0
  %1764 = vmatpush1.msra.mxu0 0.0
  %1765 = vmatprep.subr.mxu0 0.0
  %1766 = vmatpush1.msra.mxu0 0.0
  %1767 = vmatprep.mubr.f32.mxu0 0.0
  %1768 = vmatmul.mubr.f32.gmra.mrb[0].mxu0 %v598
  %v1769 = vpop.f32.mrb[0].mxu0
  %v1770 = vadd.f32 0.0, %v1769
  %v1771 = vpop.f32.mrb[0].mxu0
  %1772 = vmatprep.mubr.f32.mxu0 0.0
  %1773 = vmatmul.mubr.f32.gmra.mrb[0].mxu0 %v601
  %v1774 = vpop.f32.mrb[0].mxu0
  %v1775 = vadd.f32 0.0, %v1774
  %v1776 = vpop.f32.mrb[0].mxu0
  %1777 = vmatprep.mubr.f32.mxu0 0.0
  %1778 = vmatmul.mubr.f32.gmra.mrb[0].mxu0 %v604
  %v1779 = vpop.f32.mrb[0].mxu0
  %v1780 = vadd.f32 0.0, %v1779
  %v1781 = vpop.f32.mrb[0].mxu0
  %1782 = vmatprep.mubr.f32.mxu0 0.0
  %1783 = vmatmul.mubr.f32.gmra.mrb[0].mxu0 %v607
  %v1784 = vpop.f32.mrb[0].mxu0
  %v1785 = vadd.f32 0.0, %v1784
  %v1786 = vpop.f32.mrb[0].mxu0
  %1787 = vdwg.mxu0
  %v1788 = vadd.f32 %v1699, %v1770
  %v1789 = vadd.f32 %v1700, %v1775
  %v1790 = vadd.f32 %v1701, %v1780
  %v1791 = vadd.f32 %v1702, %v1785
  %v1792 = vxor.u32 %v1788, 2147483648
  %v1793 = vxor.u32 %v1789, 2147483648
  %v1794 = vxor.u32 %v1790, 2147483648
  %v1795 = vxor.u32 %v1791, 2147483648
  %v1796 = vmul.f32 %v1792, 1.442695
  %v1797 = vpow.pop %v1796
  %v1798 = vmul.f32 %v1793, 1.442695
  %v1799 = vpow.pop %v1798
  %v1800 = vmul.f32 %v1794, 1.442695
  %v1801 = vpow.pop %v1800
  %v1802 = vmul.f32 %v1795, 1.442695
  %v1803 = vpow.pop %v1802
  %v1804 = vadd.f32 %v1797, 1.0
  %v1805 = vadd.f32 %v1799, 1.0
  %v1806 = vadd.f32 %v1801, 1.0
  %v1807 = vadd.f32 %v1803, 1.0
  %v1808 = vrcp.pop %v1804
  %v1809 = vmul.f32 1.0, %v1808
  %v1810 = vrcp.pop %v1805
  %v1811 = vmul.f32 1.0, %v1810
  %v1812 = vrcp.pop %v1806
  %v1813 = vmul.f32 1.0, %v1812
  %v1814 = vrcp.pop %v1807
  %v1815 = vmul.f32 1.0, %v1814
  %1816 = vrot.lane.b32.xlu0 %v1173, 32
  %v1817 = vpop.permute.xlu0 %1816
  %1818 = vrot.lane.b32.xlu0 %v1174, 32
  %v1819 = vpop.permute.xlu0 %1818
  %1820 = vrot.lane.b32.xlu0 %v1175, 32
  %v1821 = vpop.permute.xlu0 %1820
  %1822 = vrot.lane.b32.xlu0 %v1176, 32
  %v1823 = vpop.permute.xlu0 %1822
  %v1828 = vmul.f32 %v1809, %v1817
  %v1829 = vmul.f32 %v1811, %v1819
  %v1830 = vmul.f32 %v1813, %v1821
  %v1831 = vmul.f32 %v1815, %v1823
  %1836 = vrot.lane.b32.xlu0 %v1828, 96
  %v1837 = vpop.permute.xlu0 %1836
  %1838 = vrot.lane.b32.xlu0 %v1829, 96
  %v1839 = vpop.permute.xlu0 %1838
  %1840 = vrot.lane.b32.xlu0 %v1830, 96
  %v1841 = vpop.permute.xlu0 %1840
  %1842 = vrot.lane.b32.xlu0 %v1831, 96
  %v1843 = vpop.permute.xlu0 %1842
  %v1844 = vsel %vm77, %v1837, 0
  %v1846 = vsel %vm77, %v1839, 0
  %v1848 = vsel %vm77, %v1841, 0
  %v1850 = vsel %vm77, %v1843, 0
  %1852 = vmatprep.subr.mxu0 0.0
  %1853 = vmatpush1.msra.mxu0 %v1200
  %1854 = vmatprep.subr.mxu0 0.0
  %1855 = vmatpush1.msra.mxu0 %v1201
  %1856 = vmatprep.subr.mxu0 0.0
  %1857 = vmatpush1.msra.mxu0 %v1202
  %1858 = vmatprep.subr.mxu0 0.0
  %1859 = vmatpush1.msra.mxu0 %v1203
  %1860 = vmatprep.subr.mxu0 0.0
  %1861 = vmatpush1.msra.mxu0 0.0
  %1862 = vmatprep.subr.mxu0 0.0
  %1863 = vmatpush1.msra.mxu0 0.0
  %1864 = vmatprep.subr.mxu0 0.0
  %1865 = vmatpush1.msra.mxu0 0.0
  %1866 = vmatprep.subr.mxu0 0.0
  %1867 = vmatpush1.msra.mxu0 0.0
  %1868 = vmatprep.subr.mxu0 0.0
  %1869 = vmatpush1.msra.mxu0 0.0
  %1870 = vmatprep.subr.mxu0 0.0
  %1871 = vmatpush1.msra.mxu0 0.0
  %1872 = vmatprep.subr.mxu0 0.0
  %1873 = vmatpush1.msra.mxu0 0.0
  %1874 = vmatprep.subr.mxu0 0.0
  %1875 = vmatpush1.msra.mxu0 0.0
  %1876 = vmatprep.subr.mxu0 0.0
  %1877 = vmatpush1.msra.mxu0 0.0
  %1878 = vmatprep.subr.mxu0 0.0
  %1879 = vmatpush1.msra.mxu0 0.0
  %1880 = vmatprep.subr.mxu0 0.0
  %1881 = vmatpush1.msra.mxu0 0.0
  %1882 = vmatprep.subr.mxu0 0.0
  %1883 = vmatpush1.msra.mxu0 0.0
  %1884 = vmatprep.subr.mxu0 0.0
  %1885 = vmatpush1.msra.mxu0 0.0
  %1886 = vmatprep.subr.mxu0 0.0
  %1887 = vmatpush1.msra.mxu0 0.0
  %1888 = vmatprep.subr.mxu0 0.0
  %1889 = vmatpush1.msra.mxu0 0.0
  %1890 = vmatprep.subr.mxu0 0.0
  %1891 = vmatpush1.msra.mxu0 0.0
  %1892 = vmatprep.subr.mxu0 0.0
  %1893 = vmatpush1.msra.mxu0 0.0
  %1894 = vmatprep.subr.mxu0 0.0
  %1895 = vmatpush1.msra.mxu0 0.0
  %1896 = vmatprep.subr.mxu0 0.0
  %1897 = vmatpush1.msra.mxu0 0.0
  %1898 = vmatprep.subr.mxu0 0.0
  %1899 = vmatpush1.msra.mxu0 0.0
  %1900 = vmatprep.subr.mxu0 0.0
  %1901 = vmatpush1.msra.mxu0 0.0
  %1902 = vmatprep.subr.mxu0 0.0
  %1903 = vmatpush1.msra.mxu0 0.0
  %1904 = vmatprep.subr.mxu0 0.0
  %1905 = vmatpush1.msra.mxu0 0.0
  %1906 = vmatprep.subr.mxu0 0.0
  %1907 = vmatpush1.msra.mxu0 0.0
  %1908 = vmatprep.subr.mxu0 0.0
  %1909 = vmatpush1.msra.mxu0 0.0
  %1910 = vmatprep.subr.mxu0 0.0
  %1911 = vmatpush1.msra.mxu0 0.0
  %1912 = vmatprep.subr.mxu0 0.0
  %1913 = vmatpush1.msra.mxu0 0.0
  %1914 = vmatprep.subr.mxu0 0.0
  %1915 = vmatpush1.msra.mxu0 0.0
  %1916 = vmatprep.mubr.f32.mxu0 0.0
  %1917 = vmatmul.mubr.f32.gmra.mrb[0].mxu0 %v1844
  %v1918 = vpop.f32.mrb[0].mxu0
  %v1919 = vadd.f32 0.0, %v1918
  %v1920 = vpop.f32.mrb[0].mxu0
  %1921 = vmatprep.mubr.f32.mxu0 0.0
  %1922 = vmatmul.mubr.f32.gmra.mrb[0].mxu0 %v1846
  %v1923 = vpop.f32.mrb[0].mxu0
  %v1924 = vadd.f32 0.0, %v1923
  %v1925 = vpop.f32.mrb[0].mxu0
  %1926 = vmatprep.mubr.f32.mxu0 0.0
  %1927 = vmatmul.mubr.f32.gmra.mrb[0].mxu0 %v1848
  %v1928 = vpop.f32.mrb[0].mxu0
  %v1929 = vadd.f32 0.0, %v1928
  %v1930 = vpop.f32.mrb[0].mxu0
  %1931 = vmatprep.mubr.f32.mxu0 0.0
  %1932 = vmatmul.mubr.f32.gmra.mrb[0].mxu0 %v1850
  %v1933 = vpop.f32.mrb[0].mxu0
  %v1934 = vadd.f32 0.0, %v1933
  %v1935 = vpop.f32.mrb[0].mxu0
  %1936 = vdwg.mxu0
  %v1937 = vadd.f32 %v1376, %v1919
  %v1938 = vadd.f32 %v1381, %v1924
  %v1939 = vadd.f32 %v1386, %v1929
  %v1940 = vadd.f32 %v1391, %v1934
  %1941 = vmatprep.subr.mxu0 0.0
  %1942 = vmatpush1.msra.mxu0 %v1937
  %1943 = vmatprep.subr.mxu0 0.0
  %1944 = vmatpush1.msra.mxu0 %v1938
  %1945 = vmatprep.subr.mxu0 0.0
  %1946 = vmatpush1.msra.mxu0 %v1939
  %1947 = vmatprep.subr.mxu0 0.0
  %1948 = vmatpush1.msra.mxu0 %v1940
  %1949 = vmatprep.subr.mxu0 0.0
  %1950 = vmatpush1.msra.mxu0 0.0
  %1951 = vmatprep.subr.mxu0 0.0
  %1952 = vmatpush1.msra.mxu0 0.0
  %1953 = vmatprep.subr.mxu0 0.0
  %1954 = vmatpush1.msra.mxu0 0.0
  %1955 = vmatprep.subr.mxu0 0.0
  %1956 = vmatpush1.msra.mxu0 0.0
  %1957 = vmatprep.subr.mxu0 0.0
  %1958 = vmatpush1.msra.mxu0 0.0
  %1959 = vmatprep.subr.mxu0 0.0
  %1960 = vmatpush1.msra.mxu0 0.0
  %1961 = vmatprep.subr.mxu0 0.0
  %1962 = vmatpush1.msra.mxu0 0.0
  %1963 = vmatprep.subr.mxu0 0.0
  %1964 = vmatpush1.msra.mxu0 0.0
  %1965 = vmatprep.subr.mxu0 0.0
  %1966 = vmatpush1.msra.mxu0 0.0
  %1967 = vmatprep.subr.mxu0 0.0
  %1968 = vmatpush1.msra.mxu0 0.0
  %1969 = vmatprep.subr.mxu0 0.0
  %1970 = vmatpush1.msra.mxu0 0.0
  %1971 = vmatprep.subr.mxu0 0.0
  %1972 = vmatpush1.msra.mxu0 0.0
  %1973 = vmatprep.subr.mxu0 0.0
  %1974 = vmatpush1.msra.mxu0 0.0
  %1975 = vmatprep.subr.mxu0 0.0
  %1976 = vmatpush1.msra.mxu0 0.0
  %1977 = vmatprep.subr.mxu0 0.0
  %1978 = vmatpush1.msra.mxu0 0.0
  %1979 = vmatprep.subr.mxu0 0.0
  %1980 = vmatpush1.msra.mxu0 0.0
  %1981 = vmatprep.subr.mxu0 0.0
  %1982 = vmatpush1.msra.mxu0 0.0
  %1983 = vmatprep.subr.mxu0 0.0
  %1984 = vmatpush1.msra.mxu0 0.0
  %1985 = vmatprep.subr.mxu0 0.0
  %1986 = vmatpush1.msra.mxu0 0.0
  %1987 = vmatprep.subr.mxu0 0.0
  %1988 = vmatpush1.msra.mxu0 0.0
  %1989 = vmatprep.subr.mxu0 0.0
  %1990 = vmatpush1.msra.mxu0 0.0
  %1991 = vmatprep.subr.mxu0 0.0
  %1992 = vmatpush1.msra.mxu0 0.0
  %1993 = vmatprep.subr.mxu0 0.0
  %1994 = vmatpush1.msra.mxu0 0.0
  %1995 = vmatprep.subr.mxu0 0.0
  %1996 = vmatpush1.msra.mxu0 0.0
  %1997 = vmatprep.subr.mxu0 0.0
  %1998 = vmatpush1.msra.mxu0 0.0
  %1999 = vmatprep.subr.mxu0 0.0
  %2000 = vmatpush1.msra.mxu0 0.0
  %2001 = vmatprep.subr.mxu0 0.0
  %2002 = vmatpush1.msra.mxu0 0.0
  %2003 = vmatprep.subr.mxu0 0.0
  %2004 = vmatpush1.msra.mxu0 0.0
  %2005 = vmatprep.mubr.f32.mxu0 0.0
  %2006 = vmatmul.mubr.f32.gmra.mrb[0].mxu0 %v374
  %v2007 = vpop.f32.mrb[0].mxu0
  %v2008 = vadd.f32 0.0, %v2007
  %v2009 = vpop.f32.mrb[0].mxu0
  %2010 = vmatprep.mubr.f32.mxu0 0.0
  %2011 = vmatmul.mubr.f32.gmra.mrb[0].mxu0 %v377
  %v2012 = vpop.f32.mrb[0].mxu0
  %v2013 = vadd.f32 0.0, %v2012
  %v2014 = vpop.f32.mrb[0].mxu0
  %2015 = vmatprep.mubr.f32.mxu0 0.0
  %2016 = vmatmul.mubr.f32.gmra.mrb[0].mxu0 %v380
  %v2017 = vpop.f32.mrb[0].mxu0
  %v2018 = vadd.f32 0.0, %v2017
  %v2019 = vpop.f32.mrb[0].mxu0
  %2020 = vmatprep.mubr.f32.mxu0 0.0
  %2021 = vmatmul.mubr.f32.gmra.mrb[0].mxu0 %v383
  %v2022 = vpop.f32.mrb[0].mxu0
  %v2023 = vadd.f32 0.0, %v2022
  %v2024 = vpop.f32.mrb[0].mxu0
  %2025 = vdwg.mxu0
  %v2027 = vlaneseq
  %v2028 = vshrl.u32 %v2027, 7
  %v2029 = vsub.s32 0, %v2028
  %v2030 = vrot.slane %v1207, %v2029
  %v2032 = vadd.f32 %v2030, %v2008
  %v2033 = vadd.f32 %v2030, %v2013
  %v2034 = vadd.f32 %v2030, %v2018
  %v2035 = vadd.f32 %v2030, %v2023
  %2040 = vrot.lane.b32.xlu0 %v1937, 96
  %v2041 = vpop.permute.xlu0 %2040
  %2042 = vrot.lane.b32.xlu0 %v1938, 96
  %v2043 = vpop.permute.xlu0 %2042
  %2044 = vrot.lane.b32.xlu0 %v1939, 96
  %v2045 = vpop.permute.xlu0 %2044
  %2046 = vrot.lane.b32.xlu0 %v1940, 96
  %v2047 = vpop.permute.xlu0 %2046
  %2052 = vmatprep.subr.mxu0 0.0
  %2053 = vmatpush1.msra.mxu0 %v2041
  %2054 = vmatprep.subr.mxu0 0.0
  %2055 = vmatpush1.msra.mxu0 %v2043
  %2056 = vmatprep.subr.mxu0 0.0
  %2057 = vmatpush1.msra.mxu0 %v2045
  %2058 = vmatprep.subr.mxu0 0.0
  %2059 = vmatpush1.msra.mxu0 %v2047
  %2060 = vmatprep.subr.mxu0 0.0
  %2061 = vmatpush1.msra.mxu0 0.0
  %2062 = vmatprep.subr.mxu0 0.0
  %2063 = vmatpush1.msra.mxu0 0.0
  %2064 = vmatprep.subr.mxu0 0.0
  %2065 = vmatpush1.msra.mxu0 0.0
  %2066 = vmatprep.subr.mxu0 0.0
  %2067 = vmatpush1.msra.mxu0 0.0
  %2068 = vmatprep.subr.mxu0 0.0
  %2069 = vmatpush1.msra.mxu0 0.0
  %2070 = vmatprep.subr.mxu0 0.0
  %2071 = vmatpush1.msra.mxu0 0.0
  %2072 = vmatprep.subr.mxu0 0.0
  %2073 = vmatpush1.msra.mxu0 0.0
  %2074 = vmatprep.subr.mxu0 0.0
  %2075 = vmatpush1.msra.mxu0 0.0
  %2076 = vmatprep.subr.mxu0 0.0
  %2077 = vmatpush1.msra.mxu0 0.0
  %2078 = vmatprep.subr.mxu0 0.0
  %2079 = vmatpush1.msra.mxu0 0.0
  %2080 = vmatprep.subr.mxu0 0.0
  %2081 = vmatpush1.msra.mxu0 0.0
  %2082 = vmatprep.subr.mxu0 0.0
  %2083 = vmatpush1.msra.mxu0 0.0
  %2084 = vmatprep.subr.mxu0 0.0
  %2085 = vmatpush1.msra.mxu0 0.0
  %2086 = vmatprep.subr.mxu0 0.0
  %2087 = vmatpush1.msra.mxu0 0.0
  %2088 = vmatprep.subr.mxu0 0.0
  %2089 = vmatpush1.msra.mxu0 0.0
  %2090 = vmatprep.subr.mxu0 0.0
  %2091 = vmatpush1.msra.mxu0 0.0
  %2092 = vmatprep.subr.mxu0 0.0
  %2093 = vmatpush1.msra.mxu0 0.0
  %2094 = vmatprep.subr.mxu0 0.0
  %2095 = vmatpush1.msra.mxu0 0.0
  %2096 = vmatprep.subr.mxu0 0.0
  %2097 = vmatpush1.msra.mxu0 0.0
  %2098 = vmatprep.subr.mxu0 0.0
  %2099 = vmatpush1.msra.mxu0 0.0
  %2100 = vmatprep.subr.mxu0 0.0
  %2101 = vmatpush1.msra.mxu0 0.0
  %2102 = vmatprep.subr.mxu0 0.0
  %2103 = vmatpush1.msra.mxu0 0.0
  %2104 = vmatprep.subr.mxu0 0.0
  %2105 = vmatpush1.msra.mxu0 0.0
  %2106 = vmatprep.subr.mxu0 0.0
  %2107 = vmatpush1.msra.mxu0 0.0
  %2108 = vmatprep.subr.mxu0 0.0
  %2109 = vmatpush1.msra.mxu0 0.0
  %2110 = vmatprep.subr.mxu0 0.0
  %2111 = vmatpush1.msra.mxu0 0.0
  %2112 = vmatprep.subr.mxu0 0.0
  %2113 = vmatpush1.msra.mxu0 0.0
  %2114 = vmatprep.subr.mxu0 0.0
  %2115 = vmatpush1.msra.mxu0 0.0
  %2116 = vmatprep.mubr.f32.mxu0 0.0
  %2117 = vmatmul.mubr.f32.gmra.mrb[0].mxu0 %v497
  %v2118 = vpop.f32.mrb[0].mxu0
  %v2119 = vadd.f32 0.0, %v2118
  %v2120 = vpop.f32.mrb[0].mxu0
  %2121 = vmatprep.mubr.f32.mxu0 0.0
  %2122 = vmatmul.mubr.f32.gmra.mrb[0].mxu0 %v500
  %v2123 = vpop.f32.mrb[0].mxu0
  %v2124 = vadd.f32 0.0, %v2123
  %v2125 = vpop.f32.mrb[0].mxu0
  %2126 = vmatprep.mubr.f32.mxu0 0.0
  %2127 = vmatmul.mubr.f32.gmra.mrb[0].mxu0 %v503
  %v2128 = vpop.f32.mrb[0].mxu0
  %v2129 = vadd.f32 0.0, %v2128
  %v2130 = vpop.f32.mrb[0].mxu0
  %2131 = vmatprep.mubr.f32.mxu0 0.0
  %2132 = vmatmul.mubr.f32.gmra.mrb[0].mxu0 %v506
  %v2133 = vpop.f32.mrb[0].mxu0
  %v2134 = vadd.f32 0.0, %v2133
  %v2135 = vpop.f32.mrb[0].mxu0
  %2136 = vdwg.mxu0
  %v2137 = vadd.f32 %v2032, %v2119
  %v2138 = vadd.f32 %v2033, %v2124
  %v2139 = vadd.f32 %v2034, %v2129
  %v2140 = vadd.f32 %v2035, %v2134
  %2141 = vrot.lane.b32.xlu0 %v1937, 64
  %v2142 = vpop.permute.xlu0 %2141
  %2143 = vrot.lane.b32.xlu0 %v1938, 64
  %v2144 = vpop.permute.xlu0 %2143
  %2145 = vrot.lane.b32.xlu0 %v1939, 64
  %v2146 = vpop.permute.xlu0 %2145
  %2147 = vrot.lane.b32.xlu0 %v1940, 64
  %v2148 = vpop.permute.xlu0 %2147
  %2153 = vmatprep.subr.mxu0 0.0
  %2154 = vmatpush1.msra.mxu0 %v2142
  %2155 = vmatprep.subr.mxu0 0.0
  %2156 = vmatpush1.msra.mxu0 %v2144
  %2157 = vmatprep.subr.mxu0 0.0
  %2158 = vmatpush1.msra.mxu0 %v2146
  %2159 = vmatprep.subr.mxu0 0.0
  %2160 = vmatpush1.msra.mxu0 %v2148
  %2161 = vmatprep.subr.mxu0 0.0
  %2162 = vmatpush1.msra.mxu0 0.0
  %2163 = vmatprep.subr.mxu0 0.0
  %2164 = vmatpush1.msra.mxu0 0.0
  %2165 = vmatprep.subr.mxu0 0.0
  %2166 = vmatpush1.msra.mxu0 0.0
  %2167 = vmatprep.subr.mxu0 0.0
  %2168 = vmatpush1.msra.mxu0 0.0
  %2169 = vmatprep.subr.mxu0 0.0
  %2170 = vmatpush1.msra.mxu0 0.0
  %2171 = vmatprep.subr.mxu0 0.0
  %2172 = vmatpush1.msra.mxu0 0.0
  %2173 = vmatprep.subr.mxu0 0.0
  %2174 = vmatpush1.msra.mxu0 0.0
  %2175 = vmatprep.subr.mxu0 0.0
  %2176 = vmatpush1.msra.mxu0 0.0
  %2177 = vmatprep.subr.mxu0 0.0
  %2178 = vmatpush1.msra.mxu0 0.0
  %2179 = vmatprep.subr.mxu0 0.0
  %2180 = vmatpush1.msra.mxu0 0.0
  %2181 = vmatprep.subr.mxu0 0.0
  %2182 = vmatpush1.msra.mxu0 0.0
  %2183 = vmatprep.subr.mxu0 0.0
  %2184 = vmatpush1.msra.mxu0 0.0
  %2185 = vmatprep.subr.mxu0 0.0
  %2186 = vmatpush1.msra.mxu0 0.0
  %2187 = vmatprep.subr.mxu0 0.0
  %2188 = vmatpush1.msra.mxu0 0.0
  %2189 = vmatprep.subr.mxu0 0.0
  %2190 = vmatpush1.msra.mxu0 0.0
  %2191 = vmatprep.subr.mxu0 0.0
  %2192 = vmatpush1.msra.mxu0 0.0
  %2193 = vmatprep.subr.mxu0 0.0
  %2194 = vmatpush1.msra.mxu0 0.0
  %2195 = vmatprep.subr.mxu0 0.0
  %2196 = vmatpush1.msra.mxu0 0.0
  %2197 = vmatprep.subr.mxu0 0.0
  %2198 = vmatpush1.msra.mxu0 0.0
  %2199 = vmatprep.subr.mxu0 0.0
  %2200 = vmatpush1.msra.mxu0 0.0
  %2201 = vmatprep.subr.mxu0 0.0
  %2202 = vmatpush1.msra.mxu0 0.0
  %2203 = vmatprep.subr.mxu0 0.0
  %2204 = vmatpush1.msra.mxu0 0.0
  %2205 = vmatprep.subr.mxu0 0.0
  %2206 = vmatpush1.msra.mxu0 0.0
  %2207 = vmatprep.subr.mxu0 0.0
  %2208 = vmatpush1.msra.mxu0 0.0
  %2209 = vmatprep.subr.mxu0 0.0
  %2210 = vmatpush1.msra.mxu0 0.0
  %2211 = vmatprep.subr.mxu0 0.0
  %2212 = vmatpush1.msra.mxu0 0.0
  %2213 = vmatprep.subr.mxu0 0.0
  %2214 = vmatpush1.msra.mxu0 0.0
  %2215 = vmatprep.subr.mxu0 0.0
  %2216 = vmatpush1.msra.mxu0 0.0
  %2217 = vmatprep.mubr.f32.mxu0 0.0
  %2218 = vmatmul.mubr.f32.gmra.mrb[0].mxu0 %v598
  %v2219 = vpop.f32.mrb[0].mxu0
  %v2220 = vadd.f32 0.0, %v2219
  %v2221 = vpop.f32.mrb[0].mxu0
  %2222 = vmatprep.mubr.f32.mxu0 0.0
  %2223 = vmatmul.mubr.f32.gmra.mrb[0].mxu0 %v601
  %v2224 = vpop.f32.mrb[0].mxu0
  %v2225 = vadd.f32 0.0, %v2224
  %v2226 = vpop.f32.mrb[0].mxu0
  %2227 = vmatprep.mubr.f32.mxu0 0.0
  %2228 = vmatmul.mubr.f32.gmra.mrb[0].mxu0 %v604
  %v2229 = vpop.f32.mrb[0].mxu0
  %v2230 = vadd.f32 0.0, %v2229
  %v2231 = vpop.f32.mrb[0].mxu0
  %2232 = vmatprep.mubr.f32.mxu0 0.0
  %2233 = vmatmul.mubr.f32.gmra.mrb[0].mxu0 %v607
  %v2234 = vpop.f32.mrb[0].mxu0
  %v2235 = vadd.f32 0.0, %v2234
  %v2236 = vpop.f32.mrb[0].mxu0
  %2237 = vdwg.mxu0
  %v2238 = vadd.f32 %v2137, %v2220
  %v2239 = vadd.f32 %v2138, %v2225
  %v2240 = vadd.f32 %v2139, %v2230
  %v2241 = vadd.f32 %v2140, %v2235
  %v2242 = vtanh.pop %v2238
  %v2243 = vtanh.pop %v2239
  %v2244 = vtanh.pop %v2240
  %v2245 = vtanh.pop %v2241
  %v2246 = vmul.f32 %v1809, %v2242
  %v2247 = vmul.f32 %v1811, %v2243
  %v2248 = vmul.f32 %v1813, %v2244
  %v2249 = vmul.f32 %v1815, %v2245
  %v2250 = vsub.f32 1.0, %v1809
  %v2251 = vsub.f32 1.0, %v1811
  %v2252 = vsub.f32 1.0, %v1813
  %v2253 = vsub.f32 1.0, %v1815
  %v2254 = vmul.f32 %v2250, %v1173
  %v2255 = vmul.f32 %v2251, %v1174
  %v2256 = vmul.f32 %v2252, %v1175
  %v2257 = vmul.f32 %v2253, %v1176
  %v2258 = vadd.f32 %v2246, %v2254
  %v2259 = vadd.f32 %v2247, %v2255
  %v2260 = vadd.f32 %v2248, %v2256
  %v2261 = vadd.f32 %v2249, %v2257
  %s2262 = scalar_lea.vmem %s8, 32
  %2263 = vst.msk [vmem:[%s2262] sm:$0xff] %vm77, %v2258
  %2264 = vst.msk [vmem:[%s2262 + $0x8] sm:$0xff] %vm77, %v2259
  %2265 = vst.msk [vmem:[%s2262 + $0x10] sm:$0xff] %vm77, %v2260
  %2266 = vst.msk [vmem:[%s2262 + $0x18] sm:$0xff] %vm77, %v2261
  // Predicated region
  $region34: #{decoder_pallas.1} parent=0 // pred_check
    _
  $region35: #{decoder_pallas.1} parent=0 // pred_check_branch
    %2268 = sbr.rel (0) target = $region37
  $region36: #{decoder_pallas.1} parent=0 // pred_region
    _
  $region37: #{decoder_pallas.1} parent=0 // pred_fallthru
    _
  // Predicated region
  $region38: #{decoder_pallas.1} parent=0 // pred_check
    _
  $region39: #{decoder_pallas.1} parent=0 // pred_check_branch
    %2270 = sbr.rel (0) target = $region41
  $region40: #{decoder_pallas.1} parent=0 // pred_region
    _
  $region41: #{decoder_pallas.1} parent=0 // pred_fallthru
    _

</llo_original>
